<compile_context>
chip_gen: v5e
topology: v5e:2x2
jax: 0.10.0
libtpu: 0.0.40
codegen_flags: <defaults>
</compile_context>

<pallas_src>
import functools
import math

import jax
import jax.numpy as jnp
from jax.experimental import pallas as pl
from jax.experimental.pallas import tpu as pltpu

# ----------------------------- config (small, synthetic BERT) ----------------
VOCAB = 100
TYPE_VOCAB = 2
MAX_POS = 64
HIDDEN = 32          # config.bertoutput_size
N_HEADS = 2
HEAD_DIM = HIDDEN // N_HEADS
FFN = 64
N_LAYERS = 2
MER_SIZE = 16
MEN_SIZE = 8
LN_EPS = 1e-12


# ----------------------------- fused Pallas kernel ----------------------------
def _mtrefine_kernel(bsz, seq,
                     emb_ref, bias_ref, eg_ref, eb_ref,
                     wqkv_ref, bqkv_ref, wo_ref, bo_ref,
                     g1_ref, be1_ref, w1_ref, b1_ref, w2_ref, b2_ref,
                     g2_ref, be2_ref, wh_ref, bh_ref,
                     out_ref):
    """Whole MTRefine forward (post-embedding-gather) in one kernel.

    emb:  [B*S, H]      summed word+pos+type embeddings (pre-LayerNorm)
    bias: [B*S, B*S]    additive attention bias (block-diag batch + padding mask)
    per-layer weights stacked along a leading [L, ...] axis
    out:  [B*S, MER+MEN]  concatenated fMer / fMen outputs
    """
    bs = bsz * seq
    scale = 1.0 / math.sqrt(HEAD_DIM)

    def layernorm(x, g, b):
        mu = jnp.mean(x, axis=-1, keepdims=True)
        var = jnp.mean(jnp.square(x - mu), axis=-1, keepdims=True)
        return (x - mu) * jax.lax.rsqrt(var + LN_EPS) * g + b

    # --- embedding LayerNorm (folded into the kernel) ---
    h = layernorm(emb_ref[...], eg_ref[...], eb_ref[...])            # [BS, H]

    attn_bias = bias_ref[...]                                        # [BS, BS]

    # --- encoder layers (static, unrolled loop; L = 2) ---
    for l in range(N_LAYERS):
        xf = h                                                       # [BS, H]

        # fused Q/K/V projection: one [H, 3H] matmul
        qkv = (jnp.dot(xf, wqkv_ref[l], preferred_element_type=jnp.float32)
               + bqkv_ref[l])                                        # [BS, 3H]

        wo_l = wo_ref[l]                                             # [H, H]
        attn = jnp.zeros((bs, HIDDEN), dtype=jnp.float32)
        for hd in range(N_HEADS):                                    # static, nH = 2
            o = hd * HEAD_DIM
            q_h = qkv[:, o:o + HEAD_DIM]                             # [BS, Dh]
            k_h = qkv[:, HIDDEN + o:HIDDEN + o + HEAD_DIM]           # [BS, Dh]
            v_h = qkv[:, 2 * HIDDEN + o:2 * HIDDEN + o + HEAD_DIM]   # [BS, Dh]

            # q @ k^T without an explicit transpose (contract last dims)
            s_h = jax.lax.dot_general(
                q_h, k_h, (((1,), (1,)), ((), ())),
                preferred_element_type=jnp.float32) * scale          # [BS, BS]
            s_h = s_h + attn_bias

            m = jnp.max(s_h, axis=-1, keepdims=True)
            p = jnp.exp(s_h - m)
            p = p / jnp.sum(p, axis=-1, keepdims=True)               # softmax
            ctx = jnp.dot(p, v_h, preferred_element_type=jnp.float32)  # [BS, Dh]

            # fold the per-head slice of the output projection in here
            attn = attn + jnp.dot(ctx, wo_l[o:o + HEAD_DIM, :],
                                  preferred_element_type=jnp.float32)
        attn = attn + bo_ref[l]

        h1 = layernorm(attn + xf, g1_ref[l], be1_ref[l])             # [BS, H]

        ff = (jnp.dot(h1, w1_ref[l], preferred_element_type=jnp.float32)
              + b1_ref[l])                                           # [BS, FFN]
        # TODO(synk): PyTorch BERT default is the exact erf-GELU; tanh approx used here.
        ff = jax.nn.gelu(ff, approximate=True)
        ff = (jnp.dot(ff, w2_ref[l], preferred_element_type=jnp.float32)
              + b2_ref[l])                                           # [BS, H]
        h = layernorm(ff + h1, g2_ref[l], be2_ref[l])

    # --- fused fMer / fMen heads: single [H, MER+MEN] matmul ---
    out_ref[...] = (jnp.dot(h, wh_ref[...], preferred_element_type=jnp.float32)
                    + bh_ref[...])


def _mtrefine_pallas(emb2, attn_bias, packed, bsz, seq):
    inputs = [emb2, attn_bias,
              packed["emb_ln_g"], packed["emb_ln_b"],
              packed["wqkv"], packed["bqkv"], packed["wo"], packed["bo"],
              packed["ln1_g"], packed["ln1_b"],
              packed["w1"], packed["b1"], packed["w2"], packed["b2"],
              packed["ln2_g"], packed["ln2_b"],
              packed["w_heads"], packed["b_heads"]]

    def full_spec(a):
        nd = a.ndim
        return pl.BlockSpec(a.shape, lambda i, _nd=nd: (0,) * _nd)

    out_w = MER_SIZE + MEN_SIZE
    kernel = functools.partial(_mtrefine_kernel, bsz, seq)
    return pl.pallas_call(
        kernel,
        out_shape=jax.ShapeDtypeStruct((bsz * seq, out_w), jnp.float32),
        grid=(1,),
        in_specs=[full_spec(a) for a in inputs],
        out_specs=pl.BlockSpec((bsz * seq, out_w), lambda i: (0, 0)),
        compiler_params=pltpu.CompilerParams(
            dimension_semantics=("arbitrary",)),
    )(*inputs)


# ----------------------------- parameter init / packing -----------------------
def init_params(key):
    def nrm(k, shape, scale=0.02):
        return (scale * jax.random.normal(k, shape)).astype(jnp.float32)

    keys = iter(jax.random.split(key, 64))
    params = {
        "word_emb": nrm(next(keys), (VOCAB, HIDDEN)),
        "pos_emb": nrm(next(keys), (MAX_POS, HIDDEN)),
        "type_emb": nrm(next(keys), (TYPE_VOCAB, HIDDEN)),
        "emb_ln_g": jnp.ones((HIDDEN,), jnp.float32),
        "emb_ln_b": jnp.zeros((HIDDEN,), jnp.float32),
        "layers": [],
        # MTRefine heads: fMer / fMen  (stored as [in, out])
        "w_mer": nrm(next(keys), (HIDDEN, MER_SIZE)),
        "b_mer": jnp.zeros((MER_SIZE,), jnp.float32),
        "w_men": nrm(next(keys), (HIDDEN, MEN_SIZE)),
        "b_men": jnp.zeros((MEN_SIZE,), jnp.float32),
    }
    for _ in range(N_LAYERS):
        params["layers"].append({
            "wq": nrm(next(keys), (HIDDEN, HIDDEN)),
            "bq": jnp.zeros((HIDDEN,), jnp.float32),
            "wk": nrm(next(keys), (HIDDEN, HIDDEN)),
            "bk": jnp.zeros((HIDDEN,), jnp.float32),
            "wv": nrm(next(keys), (HIDDEN, HIDDEN)),
            "bv": jnp.zeros((HIDDEN,), jnp.float32),
            "wo": nrm(next(keys), (HIDDEN, HIDDEN)),
            "bo": jnp.zeros((HIDDEN,), jnp.float32),
            "ln1_g": jnp.ones((HIDDEN,), jnp.float32),
            "ln1_b": jnp.zeros((HIDDEN,), jnp.float32),
            "w1": nrm(next(keys), (HIDDEN, FFN)),
            "b1": jnp.zeros((FFN,), jnp.float32),
            "w2": nrm(next(keys), (FFN, HIDDEN)),
            "b2": jnp.zeros((HIDDEN,), jnp.float32),
            "ln2_g": jnp.ones((HIDDEN,), jnp.float32),
            "ln2_b": jnp.zeros((HIDDEN,), jnp.float32),
        })
    return params


def pack_params(p):
    """Concatenate QKV / head weights and stack per-layer weights -> [L, ...]."""
    def st(name):
        return jnp.stack([lp[name] for lp in p["layers"]], axis=0)

    def st_row(name):                                   # bias -> [L, 1, dim]
        return jnp.stack([lp[name] for lp in p["layers"]], axis=0)[:, None, :]

    wqkv = jnp.stack(
        [jnp.concatenate([lp["wq"], lp["wk"], lp["wv"]], axis=1)
         for lp in p["layers"]], axis=0)                             # [L, H, 3H]
    bqkv = jnp.stack(
        [jnp.concatenate([lp["bq"], lp["bk"], lp["bv"]], axis=0)
         for lp in p["layers"]], axis=0)[:, None, :]                 # [L, 1, 3H]

    return {
        "word_emb": p["word_emb"],
        "pos_emb": p["pos_emb"],
        "type_emb": p["type_emb"],
        "emb_ln_g": p["emb_ln_g"].reshape(1, HIDDEN),
        "emb_ln_b": p["emb_ln_b"].reshape(1, HIDDEN),
        "wqkv": wqkv, "bqkv": bqkv,
        "wo": st("wo"), "bo": st_row("bo"),
        "ln1_g": st_row("ln1_g"), "ln1_b": st_row("ln1_b"),
        "w1": st("w1"), "b1": st_row("b1"),
        "w2": st("w2"), "b2": st_row("b2"),
        "ln2_g": st_row("ln2_g"), "ln2_b": st_row("ln2_b"),
        "w_heads": jnp.concatenate([p["w_mer"], p["w_men"]], axis=1),   # [H, 24]
        "b_heads": jnp.concatenate([p["b_mer"], p["b_men"]], axis=0)[None, :],
    }


# ----------------------------- forward pass ------------------------------------
def _build_attn_bias(mask_f, bsz, seq):
    """[B, S] key mask -> [B*S, B*S] additive bias (block-diag batch + padding)."""
    bs = bsz * seq
    key_mask = mask_f.reshape(bs)                                 # [BS]
    batch_id = jnp.repeat(jnp.arange(bsz, dtype=jnp.int32), seq)  # [BS]
    same_batch = (batch_id[:, None] == batch_id[None, :]).astype(jnp.float32)
    pad = (1.0 - key_mask)[None, :]                               # [1, BS]
    # in-batch unmasked -> 0; in-batch masked -> -10000 (matches HF BERT);
    # cross-batch -> <= -10000 (softmax weight underflows to 0)
    return -10000.0 * (pad + (1.0 - same_batch))                  # [BS, BS]


@jax.jit
def mtrefine_forward(packed, x, input_mask, segment_test):
    """MTRefine.forward(x, input_mask, segment_test) -> (y1, y2)."""
    x = x.astype(jnp.int32)
    input_mask = input_mask.astype(jnp.int32)
    segment_test = segment_test.astype(jnp.int32)
    bsz, s = x.shape

    # --- BERT embedding gathers + attention bias (plain-JAX glue) ---
    emb = (
        jnp.take(packed["word_emb"], x, axis=0)
        + packed["pos_emb"][:s][None, :, :]
        + jnp.take(packed["type_emb"], segment_test, axis=0)
    )                                                             # [B, S, H]
    emb2 = emb.reshape(bsz * s, HIDDEN)
    attn_bias = _build_attn_bias(input_mask.astype(jnp.float32), bsz, s)

    # --- everything else: one fused Pallas kernel ---
    yy = _mtrefine_pallas(emb2, attn_bias, packed, bsz, s)        # [B*S, MER+MEN]

    y1 = yy[:, :MER_SIZE].reshape(bsz, s, MER_SIZE)
    y2 = yy[:, MER_SIZE:].reshape(bsz, s, MEN_SIZE)
    return y1, y2


# ----------------------------- main --------------------------------------------
if __name__ == "__main__":
    key = jax.random.PRNGKey(0)
    pkey, xkey = jax.random.split(key)
    params = init_params(pkey)
    packed = pack_params(params)

    B, S = 2, 8
    x_ids = jax.random.randint(xkey, (B, S), 0, VOCAB, dtype=jnp.int32)
    input_mask = jnp.array(
        [[1, 1, 1, 1, 1, 1, 1, 1],
         [1, 1, 1, 1, 1, 1, 0, 0]], dtype=jnp.int32)
    segment_test = jnp.array(
        [[0, 0, 0, 0, 1, 1, 1, 1],
         [0, 0, 0, 1, 1, 1, 1, 1]], dtype=jnp.int32)

    y1, y2 = mtrefine_forward(packed, x_ids, input_mask, segment_test)
    jax.block_until_ready((y1, y2))

    assert y1.shape == (B, S, MER_SIZE) and y2.shape == (B, S, MEN_SIZE)
    assert y1.dtype == jnp.float32 and y2.dtype == jnp.float32
    assert bool(jnp.all(jnp.isfinite(y1))) and bool(jnp.all(jnp.isfinite(y2)))
    print("KERNEL_OK")
</pallas_src>

<mosaic_0001>
module attributes {stable_mosaic.version = 11 : i64} {
  func.func @_mtrefine_kernel(%arg0: i32, %arg1: memref<16x32xf32, #tpu.memory_space<vmem>>, %arg2: memref<16x16xf32, #tpu.memory_space<vmem>>, %arg3: memref<1x32xf32, #tpu.memory_space<vmem>>, %arg4: memref<1x32xf32, #tpu.memory_space<vmem>>, %arg5: memref<2x32x96xf32, #tpu.memory_space<vmem>>, %arg6: memref<2x1x96xf32, #tpu.memory_space<vmem>>, %arg7: memref<2x32x32xf32, #tpu.memory_space<vmem>>, %arg8: memref<2x1x32xf32, #tpu.memory_space<vmem>>, %arg9: memref<2x1x32xf32, #tpu.memory_space<vmem>>, %arg10: memref<2x1x32xf32, #tpu.memory_space<vmem>>, %arg11: memref<2x32x64xf32, #tpu.memory_space<vmem>>, %arg12: memref<2x1x64xf32, #tpu.memory_space<vmem>>, %arg13: memref<2x64x32xf32, #tpu.memory_space<vmem>>, %arg14: memref<2x1x32xf32, #tpu.memory_space<vmem>>, %arg15: memref<2x1x32xf32, #tpu.memory_space<vmem>>, %arg16: memref<2x1x32xf32, #tpu.memory_space<vmem>>, %arg17: memref<32x24xf32, #tpu.memory_space<vmem>>, %arg18: memref<1x24xf32, #tpu.memory_space<vmem>>, %arg19: memref<16x24xf32, #tpu.memory_space<vmem>>) attributes {dimension_semantics = [#tpu.dimension_semantics<arbitrary>], iteration_bounds = array<i64: 1>, scalar_prefetch = 0 : i64, scratch_operands = 0 : i64, tpu.core_type = #tpu.core_type<tc>, window_params = [{pipeline_mode = #tpu.pipeline_mode<synchronous>, transform_indices = @transform_0, window_bounds = array<i64: 16, 32>}, {pipeline_mode = #tpu.pipeline_mode<synchronous>, transform_indices = @transform_1, window_bounds = array<i64: 16, 16>}, {pipeline_mode = #tpu.pipeline_mode<synchronous>, transform_indices = @transform_2, window_bounds = array<i64: 1, 32>}, {pipeline_mode = #tpu.pipeline_mode<synchronous>, transform_indices = @transform_3, window_bounds = array<i64: 1, 32>}, {pipeline_mode = #tpu.pipeline_mode<synchronous>, transform_indices = @transform_4, window_bounds = array<i64: 2, 32, 96>}, {pipeline_mode = #tpu.pipeline_mode<synchronous>, transform_indices = @transform_5, window_bounds = array<i64: 2, 1, 96>}, {pipeline_mode = #tpu.pipeline_mode<synchronous>, transform_indices = @transform_6, window_bounds = array<i64: 2, 32, 32>}, {pipeline_mode = #tpu.pipeline_mode<synchronous>, transform_indices = @transform_7, window_bounds = array<i64: 2, 1, 32>}, {pipeline_mode = #tpu.pipeline_mode<synchronous>, transform_indices = @transform_8, window_bounds = array<i64: 2, 1, 32>}, {pipeline_mode = #tpu.pipeline_mode<synchronous>, transform_indices = @transform_9, window_bounds = array<i64: 2, 1, 32>}, {pipeline_mode = #tpu.pipeline_mode<synchronous>, transform_indices = @transform_10, window_bounds = array<i64: 2, 32, 64>}, {pipeline_mode = #tpu.pipeline_mode<synchronous>, transform_indices = @transform_11, window_bounds = array<i64: 2, 1, 64>}, {pipeline_mode = #tpu.pipeline_mode<synchronous>, transform_indices = @transform_12, window_bounds = array<i64: 2, 64, 32>}, {pipeline_mode = #tpu.pipeline_mode<synchronous>, transform_indices = @transform_13, window_bounds = array<i64: 2, 1, 32>}, {pipeline_mode = #tpu.pipeline_mode<synchronous>, transform_indices = @transform_14, window_bounds = array<i64: 2, 1, 32>}, {pipeline_mode = #tpu.pipeline_mode<synchronous>, transform_indices = @transform_15, window_bounds = array<i64: 2, 1, 32>}, {pipeline_mode = #tpu.pipeline_mode<synchronous>, transform_indices = @transform_16, window_bounds = array<i64: 32, 24>}, {pipeline_mode = #tpu.pipeline_mode<synchronous>, transform_indices = @transform_17, window_bounds = array<i64: 1, 24>}, {pipeline_mode = #tpu.pipeline_mode<synchronous>, transform_indices = @transform_18, window_bounds = array<i64: 16, 24>}]} {
    %c0 = arith.constant 0 : index
    %c0_0 = arith.constant 0 : index
    %0 = vector.load %arg1[%c0, %c0_0] : memref<16x32xf32, #tpu.memory_space<vmem>>, vector<16x32xf32>
    %c0_1 = arith.constant 0 : index
    %c0_2 = arith.constant 0 : index
    %1 = vector.load %arg3[%c0_1, %c0_2] : memref<1x32xf32, #tpu.memory_space<vmem>>, vector<1x32xf32>
    %c0_3 = arith.constant 0 : index
    %c0_4 = arith.constant 0 : index
    %2 = vector.load %arg4[%c0_3, %c0_4] : memref<1x32xf32, #tpu.memory_space<vmem>>, vector<1x32xf32>
    %cst = arith.constant dense<0.000000e+00> : vector<16xf32>
    %3 = vector.multi_reduction <add>, %0, %cst [1] : vector<16x32xf32> to vector<16xf32>
    %4 = vector.shape_cast %3 : vector<16xf32> to vector<16x1xf32>
    %cst_5 = arith.constant 3.200000e+01 : f32
    %5 = vector.broadcast %cst_5 : f32 to vector<16x1xf32>
    %6 = arith.divf %4, %5 : vector<16x1xf32>
    %7 = vector.broadcast %6 : vector<16x1xf32> to vector<16x32xf32>
    %8 = arith.subf %0, %7 : vector<16x32xf32>
    %9 = arith.mulf %8, %8 : vector<16x32xf32>
    %cst_6 = arith.constant dense<0.000000e+00> : vector<16xf32>
    %10 = vector.multi_reduction <add>, %9, %cst_6 [1] : vector<16x32xf32> to vector<16xf32>
    %11 = vector.shape_cast %10 : vector<16xf32> to vector<16x1xf32>
    %cst_7 = arith.constant 3.200000e+01 : f32
    %12 = vector.broadcast %cst_7 : f32 to vector<16x1xf32>
    %13 = arith.divf %11, %12 : vector<16x1xf32>
    %14 = vector.broadcast %6 : vector<16x1xf32> to vector<16x32xf32>
    %15 = arith.subf %0, %14 : vector<16x32xf32>
    %cst_8 = arith.constant 9.99999996E-13 : f32
    %16 = vector.broadcast %cst_8 : f32 to vector<16x1xf32>
    %17 = arith.addf %13, %16 : vector<16x1xf32>
    %18 = math.rsqrt %17 : vector<16x1xf32>
    %19 = vector.broadcast %18 : vector<16x1xf32> to vector<16x32xf32>
    %20 = arith.mulf %15, %19 : vector<16x32xf32>
    %21 = vector.broadcast %1 : vector<1x32xf32> to vector<16x32xf32>
    %22 = arith.mulf %20, %21 : vector<16x32xf32>
    %23 = vector.broadcast %2 : vector<1x32xf32> to vector<16x32xf32>
    %24 = arith.addf %22, %23 : vector<16x32xf32>
    %c0_9 = arith.constant 0 : index
    %c0_10 = arith.constant 0 : index
    %25 = vector.load %arg2[%c0_9, %c0_10] : memref<16x16xf32, #tpu.memory_space<vmem>>, vector<16x16xf32>
    %c0_11 = arith.constant 0 : index
    %c0_12 = arith.constant 0 : index
    %c0_13 = arith.constant 0 : index
    %26 = vector.load %arg5[%c0_11, %c0_12, %c0_13] : memref<2x32x96xf32, #tpu.memory_space<vmem>>, vector<1x32x96xf32>
    %27 = vector.shape_cast %26 : vector<1x32x96xf32> to vector<32x96xf32>
    %cst_14 = arith.constant dense<0.000000e+00> : vector<16x96xf32>
    %28 = tpu.matmul %24, %27, %cst_14 {dimension_numbers = #tpu.dot_dimension_numbers<[1], [0], [0], [1], [0, 0, 1, 1], [], []>} : vector<16x32xf32>, vector<32x96xf32>, vector<16x96xf32> -> vector<16x96xf32>
    %c0_15 = arith.constant 0 : index
    %c0_16 = arith.constant 0 : index
    %c0_17 = arith.constant 0 : index
    %29 = vector.load %arg6[%c0_15, %c0_16, %c0_17] : memref<2x1x96xf32, #tpu.memory_space<vmem>>, vector<1x1x96xf32>
    %30 = vector.shape_cast %29 : vector<1x1x96xf32> to vector<1x96xf32>
    %31 = vector.broadcast %30 : vector<1x96xf32> to vector<16x96xf32>
    %32 = arith.addf %28, %31 : vector<16x96xf32>
    %c0_18 = arith.constant 0 : index
    %c0_19 = arith.constant 0 : index
    %c0_20 = arith.constant 0 : index
    %33 = vector.load %arg7[%c0_18, %c0_19, %c0_20] : memref<2x32x32xf32, #tpu.memory_space<vmem>>, vector<1x32x32xf32>
    %34 = vector.shape_cast %33 : vector<1x32x32xf32> to vector<32x32xf32>
    %cst_21 = arith.constant 0.000000e+00 : f32
    %35 = vector.broadcast %cst_21 : f32 to vector<16x32xf32>
    %36 = vector.extract_strided_slice %32 {offsets = [0, 0], sizes = [16, 16], strides = [1, 1]} : vector<16x96xf32> to vector<16x16xf32>
    %37 = vector.extract_strided_slice %32 {offsets = [0, 32], sizes = [16, 16], strides = [1, 1]} : vector<16x96xf32> to vector<16x16xf32>
    %38 = vector.extract_strided_slice %32 {offsets = [0, 64], sizes = [16, 16], strides = [1, 1]} : vector<16x96xf32> to vector<16x16xf32>
    %cst_22 = arith.constant dense<0.000000e+00> : vector<16x16xf32>
    %39 = tpu.matmul %36, %37, %cst_22 {dimension_numbers = #tpu.dot_dimension_numbers<[1], [1], [0], [0], [0, 0, 1, 0], [], []>} : vector<16x16xf32>, vector<16x16xf32>, vector<16x16xf32> -> vector<16x16xf32>
    %cst_23 = arith.constant 2.500000e-01 : f32
    %40 = vector.broadcast %cst_23 : f32 to vector<16x16xf32>
    %41 = arith.mulf %39, %40 : vector<16x16xf32>
    %42 = arith.addf %41, %25 : vector<16x16xf32>
    %cst_24 = arith.constant dense<0xFF800000> : vector<16xf32>
    %43 = vector.multi_reduction <maximumf>, %42, %cst_24 [1] : vector<16x16xf32> to vector<16xf32>
    %44 = vector.shape_cast %43 : vector<16xf32> to vector<16x1xf32>
    %45 = vector.broadcast %44 : vector<16x1xf32> to vector<16x16xf32>
    %46 = arith.subf %42, %45 : vector<16x16xf32>
    %47 = math.exp %46 : vector<16x16xf32>
    %cst_25 = arith.constant dense<0.000000e+00> : vector<16xf32>
    %48 = vector.multi_reduction <add>, %47, %cst_25 [1] : vector<16x16xf32> to vector<16xf32>
    %49 = vector.shape_cast %48 : vector<16xf32> to vector<16x1xf32>
    %50 = vector.broadcast %49 : vector<16x1xf32> to vector<16x16xf32>
    %51 = arith.divf %47, %50 : vector<16x16xf32>
    %cst_26 = arith.constant dense<0.000000e+00> : vector<16x16xf32>
    %52 = tpu.matmul %51, %38, %cst_26 {dimension_numbers = #tpu.dot_dimension_numbers<[1], [0], [0], [1], [0, 0, 1, 1], [], []>} : vector<16x16xf32>, vector<16x16xf32>, vector<16x16xf32> -> vector<16x16xf32>
    %53 = vector.extract_strided_slice %34 {offsets = [0, 0], sizes = [16, 32], strides = [1, 1]} : vector<32x32xf32> to vector<16x32xf32>
    %cst_27 = arith.constant dense<0.000000e+00> : vector<16x32xf32>
    %54 = tpu.matmul %52, %53, %cst_27 {dimension_numbers = #tpu.dot_dimension_numbers<[1], [0], [0], [1], [0, 0, 1, 1], [], []>} : vector<16x16xf32>, vector<16x32xf32>, vector<16x32xf32> -> vector<16x32xf32>
    %55 = arith.addf %35, %54 : vector<16x32xf32>
    %56 = vector.extract_strided_slice %32 {offsets = [0, 16], sizes = [16, 16], strides = [1, 1]} : vector<16x96xf32> to vector<16x16xf32>
    %57 = vector.extract_strided_slice %32 {offsets = [0, 48], sizes = [16, 16], strides = [1, 1]} : vector<16x96xf32> to vector<16x16xf32>
    %58 = vector.extract_strided_slice %32 {offsets = [0, 80], sizes = [16, 16], strides = [1, 1]} : vector<16x96xf32> to vector<16x16xf32>
    %cst_28 = arith.constant dense<0.000000e+00> : vector<16x16xf32>
    %59 = tpu.matmul %56, %57, %cst_28 {dimension_numbers = #tpu.dot_dimension_numbers<[1], [1], [0], [0], [0, 0, 1, 0], [], []>} : vector<16x16xf32>, vector<16x16xf32>, vector<16x16xf32> -> vector<16x16xf32>
    %cst_29 = arith.constant 2.500000e-01 : f32
    %60 = vector.broadcast %cst_29 : f32 to vector<16x16xf32>
    %61 = arith.mulf %59, %60 : vector<16x16xf32>
    %62 = arith.addf %61, %25 : vector<16x16xf32>
    %cst_30 = arith.constant dense<0xFF800000> : vector<16xf32>
    %63 = vector.multi_reduction <maximumf>, %62, %cst_30 [1] : vector<16x16xf32> to vector<16xf32>
    %64 = vector.shape_cast %63 : vector<16xf32> to vector<16x1xf32>
    %65 = vector.broadcast %64 : vector<16x1xf32> to vector<16x16xf32>
    %66 = arith.subf %62, %65 : vector<16x16xf32>
    %67 = math.exp %66 : vector<16x16xf32>
    %cst_31 = arith.constant dense<0.000000e+00> : vector<16xf32>
    %68 = vector.multi_reduction <add>, %67, %cst_31 [1] : vector<16x16xf32> to vector<16xf32>
    %69 = vector.shape_cast %68 : vector<16xf32> to vector<16x1xf32>
    %70 = vector.broadcast %69 : vector<16x1xf32> to vector<16x16xf32>
    %71 = arith.divf %67, %70 : vector<16x16xf32>
    %cst_32 = arith.constant dense<0.000000e+00> : vector<16x16xf32>
    %72 = tpu.matmul %71, %58, %cst_32 {dimension_numbers = #tpu.dot_dimension_numbers<[1], [0], [0], [1], [0, 0, 1, 1], [], []>} : vector<16x16xf32>, vector<16x16xf32>, vector<16x16xf32> -> vector<16x16xf32>
    %73 = vector.extract_strided_slice %34 {offsets = [16, 0], sizes = [16, 32], strides = [1, 1]} : vector<32x32xf32> to vector<16x32xf32>
    %cst_33 = arith.constant dense<0.000000e+00> : vector<16x32xf32>
    %74 = tpu.matmul %72, %73, %cst_33 {dimension_numbers = #tpu.dot_dimension_numbers<[1], [0], [0], [1], [0, 0, 1, 1], [], []>} : vector<16x16xf32>, vector<16x32xf32>, vector<16x32xf32> -> vector<16x32xf32>
    %75 = arith.addf %55, %74 : vector<16x32xf32>
    %c0_34 = arith.constant 0 : index
    %c0_35 = arith.constant 0 : index
    %c0_36 = arith.constant 0 : index
    %76 = vector.load %arg8[%c0_34, %c0_35, %c0_36] : memref<2x1x32xf32, #tpu.memory_space<vmem>>, vector<1x1x32xf32>
    %77 = vector.shape_cast %76 : vector<1x1x32xf32> to vector<1x32xf32>
    %78 = vector.broadcast %77 : vector<1x32xf32> to vector<16x32xf32>
    %79 = arith.addf %75, %78 : vector<16x32xf32>
    %80 = arith.addf %79, %24 : vector<16x32xf32>
    %c0_37 = arith.constant 0 : index
    %c0_38 = arith.constant 0 : index
    %c0_39 = arith.constant 0 : index
    %81 = vector.load %arg9[%c0_37, %c0_38, %c0_39] : memref<2x1x32xf32, #tpu.memory_space<vmem>>, vector<1x1x32xf32>
    %82 = vector.shape_cast %81 : vector<1x1x32xf32> to vector<1x32xf32>
    %c0_40 = arith.constant 0 : index
    %c0_41 = arith.constant 0 : index
    %c0_42 = arith.constant 0 : index
    %83 = vector.load %arg10[%c0_40, %c0_41, %c0_42] : memref<2x1x32xf32, #tpu.memory_space<vmem>>, vector<1x1x32xf32>
    %84 = vector.shape_cast %83 : vector<1x1x32xf32> to vector<1x32xf32>
    %cst_43 = arith.constant dense<0.000000e+00> : vector<16xf32>
    %85 = vector.multi_reduction <add>, %80, %cst_43 [1] : vector<16x32xf32> to vector<16xf32>
    %86 = vector.shape_cast %85 : vector<16xf32> to vector<16x1xf32>
    %cst_44 = arith.constant 3.200000e+01 : f32
    %87 = vector.broadcast %cst_44 : f32 to vector<16x1xf32>
    %88 = arith.divf %86, %87 : vector<16x1xf32>
    %89 = vector.broadcast %88 : vector<16x1xf32> to vector<16x32xf32>
    %90 = arith.subf %80, %89 : vector<16x32xf32>
    %91 = arith.mulf %90, %90 : vector<16x32xf32>
    %cst_45 = arith.constant dense<0.000000e+00> : vector<16xf32>
    %92 = vector.multi_reduction <add>, %91, %cst_45 [1] : vector<16x32xf32> to vector<16xf32>
    %93 = vector.shape_cast %92 : vector<16xf32> to vector<16x1xf32>
    %cst_46 = arith.constant 3.200000e+01 : f32
    %94 = vector.broadcast %cst_46 : f32 to vector<16x1xf32>
    %95 = arith.divf %93, %94 : vector<16x1xf32>
    %96 = vector.broadcast %88 : vector<16x1xf32> to vector<16x32xf32>
    %97 = arith.subf %80, %96 : vector<16x32xf32>
    %cst_47 = arith.constant 9.99999996E-13 : f32
    %98 = vector.broadcast %cst_47 : f32 to vector<16x1xf32>
    %99 = arith.addf %95, %98 : vector<16x1xf32>
    %100 = math.rsqrt %99 : vector<16x1xf32>
    %101 = vector.broadcast %100 : vector<16x1xf32> to vector<16x32xf32>
    %102 = arith.mulf %97, %101 : vector<16x32xf32>
    %103 = vector.broadcast %82 : vector<1x32xf32> to vector<16x32xf32>
    %104 = arith.mulf %102, %103 : vector<16x32xf32>
    %105 = vector.broadcast %84 : vector<1x32xf32> to vector<16x32xf32>
    %106 = arith.addf %104, %105 : vector<16x32xf32>
    %c0_48 = arith.constant 0 : index
    %c0_49 = arith.constant 0 : index
    %c0_50 = arith.constant 0 : index
    %107 = vector.load %arg11[%c0_48, %c0_49, %c0_50] : memref<2x32x64xf32, #tpu.memory_space<vmem>>, vector<1x32x64xf32>
    %108 = vector.shape_cast %107 : vector<1x32x64xf32> to vector<32x64xf32>
    %cst_51 = arith.constant dense<0.000000e+00> : vector<16x64xf32>
    %109 = tpu.matmul %106, %108, %cst_51 {dimension_numbers = #tpu.dot_dimension_numbers<[1], [0], [0], [1], [0, 0, 1, 1], [], []>} : vector<16x32xf32>, vector<32x64xf32>, vector<16x64xf32> -> vector<16x64xf32>
    %c0_52 = arith.constant 0 : index
    %c0_53 = arith.constant 0 : index
    %c0_54 = arith.constant 0 : index
    %110 = vector.load %arg12[%c0_52, %c0_53, %c0_54] : memref<2x1x64xf32, #tpu.memory_space<vmem>>, vector<1x1x64xf32>
    %111 = vector.shape_cast %110 : vector<1x1x64xf32> to vector<1x64xf32>
    %112 = vector.broadcast %111 : vector<1x64xf32> to vector<16x64xf32>
    %113 = arith.addf %109, %112 : vector<16x64xf32>
    %114 = arith.mulf %113, %113 : vector<16x64xf32>
    %115 = arith.mulf %113, %114 : vector<16x64xf32>
    %cst_55 = arith.constant 4.471500e-02 : f32
    %116 = vector.broadcast %cst_55 : f32 to vector<16x64xf32>
    %117 = arith.mulf %116, %115 : vector<16x64xf32>
    %118 = arith.addf %113, %117 : vector<16x64xf32>
    %cst_56 = arith.constant 0.797884583 : f32
    %119 = vector.broadcast %cst_56 : f32 to vector<16x64xf32>
    %120 = arith.mulf %119, %118 : vector<16x64xf32>
    %121 = math.tanh %120 : vector<16x64xf32>
    %cst_57 = arith.constant 1.000000e+00 : f32
    %122 = vector.broadcast %cst_57 : f32 to vector<16x64xf32>
    %123 = arith.addf %122, %121 : vector<16x64xf32>
    %cst_58 = arith.constant 5.000000e-01 : f32
    %124 = vector.broadcast %cst_58 : f32 to vector<16x64xf32>
    %125 = arith.mulf %124, %123 : vector<16x64xf32>
    %126 = arith.mulf %113, %125 : vector<16x64xf32>
    %c0_59 = arith.constant 0 : index
    %c0_60 = arith.constant 0 : index
    %c0_61 = arith.constant 0 : index
    %127 = vector.load %arg13[%c0_59, %c0_60, %c0_61] : memref<2x64x32xf32, #tpu.memory_space<vmem>>, vector<1x64x32xf32>
    %128 = vector.shape_cast %127 : vector<1x64x32xf32> to vector<64x32xf32>
    %cst_62 = arith.constant dense<0.000000e+00> : vector<16x32xf32>
    %129 = tpu.matmul %126, %128, %cst_62 {dimension_numbers = #tpu.dot_dimension_numbers<[1], [0], [0], [1], [0, 0, 1, 1], [], []>} : vector<16x64xf32>, vector<64x32xf32>, vector<16x32xf32> -> vector<16x32xf32>
    %c0_63 = arith.constant 0 : index
    %c0_64 = arith.constant 0 : index
    %c0_65 = arith.constant 0 : index
    %130 = vector.load %arg14[%c0_63, %c0_64, %c0_65] : memref<2x1x32xf32, #tpu.memory_space<vmem>>, vector<1x1x32xf32>
    %131 = vector.shape_cast %130 : vector<1x1x32xf32> to vector<1x32xf32>
    %132 = vector.broadcast %131 : vector<1x32xf32> to vector<16x32xf32>
    %133 = arith.addf %129, %132 : vector<16x32xf32>
    %134 = arith.addf %133, %106 : vector<16x32xf32>
    %c0_66 = arith.constant 0 : index
    %c0_67 = arith.constant 0 : index
    %c0_68 = arith.constant 0 : index
    %135 = vector.load %arg15[%c0_66, %c0_67, %c0_68] : memref<2x1x32xf32, #tpu.memory_space<vmem>>, vector<1x1x32xf32>
    %136 = vector.shape_cast %135 : vector<1x1x32xf32> to vector<1x32xf32>
    %c0_69 = arith.constant 0 : index
    %c0_70 = arith.constant 0 : index
    %c0_71 = arith.constant 0 : index
    %137 = vector.load %arg16[%c0_69, %c0_70, %c0_71] : memref<2x1x32xf32, #tpu.memory_space<vmem>>, vector<1x1x32xf32>
    %138 = vector.shape_cast %137 : vector<1x1x32xf32> to vector<1x32xf32>
    %cst_72 = arith.constant dense<0.000000e+00> : vector<16xf32>
    %139 = vector.multi_reduction <add>, %134, %cst_72 [1] : vector<16x32xf32> to vector<16xf32>
    %140 = vector.shape_cast %139 : vector<16xf32> to vector<16x1xf32>
    %cst_73 = arith.constant 3.200000e+01 : f32
    %141 = vector.broadcast %cst_73 : f32 to vector<16x1xf32>
    %142 = arith.divf %140, %141 : vector<16x1xf32>
    %143 = vector.broadcast %142 : vector<16x1xf32> to vector<16x32xf32>
    %144 = arith.subf %134, %143 : vector<16x32xf32>
    %145 = arith.mulf %144, %144 : vector<16x32xf32>
    %cst_74 = arith.constant dense<0.000000e+00> : vector<16xf32>
    %146 = vector.multi_reduction <add>, %145, %cst_74 [1] : vector<16x32xf32> to vector<16xf32>
    %147 = vector.shape_cast %146 : vector<16xf32> to vector<16x1xf32>
    %cst_75 = arith.constant 3.200000e+01 : f32
    %148 = vector.broadcast %cst_75 : f32 to vector<16x1xf32>
    %149 = arith.divf %147, %148 : vector<16x1xf32>
    %150 = vector.broadcast %142 : vector<16x1xf32> to vector<16x32xf32>
    %151 = arith.subf %134, %150 : vector<16x32xf32>
    %cst_76 = arith.constant 9.99999996E-13 : f32
    %152 = vector.broadcast %cst_76 : f32 to vector<16x1xf32>
    %153 = arith.addf %149, %152 : vector<16x1xf32>
    %154 = math.rsqrt %153 : vector<16x1xf32>
    %155 = vector.broadcast %154 : vector<16x1xf32> to vector<16x32xf32>
    %156 = arith.mulf %151, %155 : vector<16x32xf32>
    %157 = vector.broadcast %136 : vector<1x32xf32> to vector<16x32xf32>
    %158 = arith.mulf %156, %157 : vector<16x32xf32>
    %159 = vector.broadcast %138 : vector<1x32xf32> to vector<16x32xf32>
    %160 = arith.addf %158, %159 : vector<16x32xf32>
    %c1 = arith.constant 1 : index
    %c0_77 = arith.constant 0 : index
    %c0_78 = arith.constant 0 : index
    %161 = vector.load %arg5[%c1, %c0_77, %c0_78] : memref<2x32x96xf32, #tpu.memory_space<vmem>>, vector<1x32x96xf32>
    %162 = vector.shape_cast %161 : vector<1x32x96xf32> to vector<32x96xf32>
    %cst_79 = arith.constant dense<0.000000e+00> : vector<16x96xf32>
    %163 = tpu.matmul %160, %162, %cst_79 {dimension_numbers = #tpu.dot_dimension_numbers<[1], [0], [0], [1], [0, 0, 1, 1], [], []>} : vector<16x32xf32>, vector<32x96xf32>, vector<16x96xf32> -> vector<16x96xf32>
    %c1_80 = arith.constant 1 : index
    %c0_81 = arith.constant 0 : index
    %c0_82 = arith.constant 0 : index
    %164 = vector.load %arg6[%c1_80, %c0_81, %c0_82] : memref<2x1x96xf32, #tpu.memory_space<vmem>>, vector<1x1x96xf32>
    %165 = vector.shape_cast %164 : vector<1x1x96xf32> to vector<1x96xf32>
    %166 = vector.broadcast %165 : vector<1x96xf32> to vector<16x96xf32>
    %167 = arith.addf %163, %166 : vector<16x96xf32>
    %c1_83 = arith.constant 1 : index
    %c0_84 = arith.constant 0 : index
    %c0_85 = arith.constant 0 : index
    %168 = vector.load %arg7[%c1_83, %c0_84, %c0_85] : memref<2x32x32xf32, #tpu.memory_space<vmem>>, vector<1x32x32xf32>
    %169 = vector.shape_cast %168 : vector<1x32x32xf32> to vector<32x32xf32>
    %cst_86 = arith.constant 0.000000e+00 : f32
    %170 = vector.broadcast %cst_86 : f32 to vector<16x32xf32>
    %171 = vector.extract_strided_slice %167 {offsets = [0, 0], sizes = [16, 16], strides = [1, 1]} : vector<16x96xf32> to vector<16x16xf32>
    %172 = vector.extract_strided_slice %167 {offsets = [0, 32], sizes = [16, 16], strides = [1, 1]} : vector<16x96xf32> to vector<16x16xf32>
    %173 = vector.extract_strided_slice %167 {offsets = [0, 64], sizes = [16, 16], strides = [1, 1]} : vector<16x96xf32> to vector<16x16xf32>
    %cst_87 = arith.constant dense<0.000000e+00> : vector<16x16xf32>
    %174 = tpu.matmul %171, %172, %cst_87 {dimension_numbers = #tpu.dot_dimension_numbers<[1], [1], [0], [0], [0, 0, 1, 0], [], []>} : vector<16x16xf32>, vector<16x16xf32>, vector<16x16xf32> -> vector<16x16xf32>
    %cst_88 = arith.constant 2.500000e-01 : f32
    %175 = vector.broadcast %cst_88 : f32 to vector<16x16xf32>
    %176 = arith.mulf %174, %175 : vector<16x16xf32>
    %177 = arith.addf %176, %25 : vector<16x16xf32>
    %cst_89 = arith.constant dense<0xFF800000> : vector<16xf32>
    %178 = vector.multi_reduction <maximumf>, %177, %cst_89 [1] : vector<16x16xf32> to vector<16xf32>
    %179 = vector.shape_cast %178 : vector<16xf32> to vector<16x1xf32>
    %180 = vector.broadcast %179 : vector<16x1xf32> to vector<16x16xf32>
    %181 = arith.subf %177, %180 : vector<16x16xf32>
    %182 = math.exp %181 : vector<16x16xf32>
    %cst_90 = arith.constant dense<0.000000e+00> : vector<16xf32>
    %183 = vector.multi_reduction <add>, %182, %cst_90 [1] : vector<16x16xf32> to vector<16xf32>
    %184 = vector.shape_cast %183 : vector<16xf32> to vector<16x1xf32>
    %185 = vector.broadcast %184 : vector<16x1xf32> to vector<16x16xf32>
    %186 = arith.divf %182, %185 : vector<16x16xf32>
    %cst_91 = arith.constant dense<0.000000e+00> : vector<16x16xf32>
    %187 = tpu.matmul %186, %173, %cst_91 {dimension_numbers = #tpu.dot_dimension_numbers<[1], [0], [0], [1], [0, 0, 1, 1], [], []>} : vector<16x16xf32>, vector<16x16xf32>, vector<16x16xf32> -> vector<16x16xf32>
    %188 = vector.extract_strided_slice %169 {offsets = [0, 0], sizes = [16, 32], strides = [1, 1]} : vector<32x32xf32> to vector<16x32xf32>
    %cst_92 = arith.constant dense<0.000000e+00> : vector<16x32xf32>
    %189 = tpu.matmul %187, %188, %cst_92 {dimension_numbers = #tpu.dot_dimension_numbers<[1], [0], [0], [1], [0, 0, 1, 1], [], []>} : vector<16x16xf32>, vector<16x32xf32>, vector<16x32xf32> -> vector<16x32xf32>
    %190 = arith.addf %170, %189 : vector<16x32xf32>
    %191 = vector.extract_strided_slice %167 {offsets = [0, 16], sizes = [16, 16], strides = [1, 1]} : vector<16x96xf32> to vector<16x16xf32>
    %192 = vector.extract_strided_slice %167 {offsets = [0, 48], sizes = [16, 16], strides = [1, 1]} : vector<16x96xf32> to vector<16x16xf32>
    %193 = vector.extract_strided_slice %167 {offsets = [0, 80], sizes = [16, 16], strides = [1, 1]} : vector<16x96xf32> to vector<16x16xf32>
    %cst_93 = arith.constant dense<0.000000e+00> : vector<16x16xf32>
    %194 = tpu.matmul %191, %192, %cst_93 {dimension_numbers = #tpu.dot_dimension_numbers<[1], [1], [0], [0], [0, 0, 1, 0], [], []>} : vector<16x16xf32>, vector<16x16xf32>, vector<16x16xf32> -> vector<16x16xf32>
    %cst_94 = arith.constant 2.500000e-01 : f32
    %195 = vector.broadcast %cst_94 : f32 to vector<16x16xf32>
    %196 = arith.mulf %194, %195 : vector<16x16xf32>
    %197 = arith.addf %196, %25 : vector<16x16xf32>
    %cst_95 = arith.constant dense<0xFF800000> : vector<16xf32>
    %198 = vector.multi_reduction <maximumf>, %197, %cst_95 [1] : vector<16x16xf32> to vector<16xf32>
    %199 = vector.shape_cast %198 : vector<16xf32> to vector<16x1xf32>
    %200 = vector.broadcast %199 : vector<16x1xf32> to vector<16x16xf32>
    %201 = arith.subf %197, %200 : vector<16x16xf32>
    %202 = math.exp %201 : vector<16x16xf32>
    %cst_96 = arith.constant dense<0.000000e+00> : vector<16xf32>
    %203 = vector.multi_reduction <add>, %202, %cst_96 [1] : vector<16x16xf32> to vector<16xf32>
    %204 = vector.shape_cast %203 : vector<16xf32> to vector<16x1xf32>
    %205 = vector.broadcast %204 : vector<16x1xf32> to vector<16x16xf32>
    %206 = arith.divf %202, %205 : vector<16x16xf32>
    %cst_97 = arith.constant dense<0.000000e+00> : vector<16x16xf32>
    %207 = tpu.matmul %206, %193, %cst_97 {dimension_numbers = #tpu.dot_dimension_numbers<[1], [0], [0], [1], [0, 0, 1, 1], [], []>} : vector<16x16xf32>, vector<16x16xf32>, vector<16x16xf32> -> vector<16x16xf32>
    %208 = vector.extract_strided_slice %169 {offsets = [16, 0], sizes = [16, 32], strides = [1, 1]} : vector<32x32xf32> to vector<16x32xf32>
    %cst_98 = arith.constant dense<0.000000e+00> : vector<16x32xf32>
    %209 = tpu.matmul %207, %208, %cst_98 {dimension_numbers = #tpu.dot_dimension_numbers<[1], [0], [0], [1], [0, 0, 1, 1], [], []>} : vector<16x16xf32>, vector<16x32xf32>, vector<16x32xf32> -> vector<16x32xf32>
    %210 = arith.addf %190, %209 : vector<16x32xf32>
    %c1_99 = arith.constant 1 : index
    %c0_100 = arith.constant 0 : index
    %c0_101 = arith.constant 0 : index
    %211 = vector.load %arg8[%c1_99, %c0_100, %c0_101] : memref<2x1x32xf32, #tpu.memory_space<vmem>>, vector<1x1x32xf32>
    %212 = vector.shape_cast %211 : vector<1x1x32xf32> to vector<1x32xf32>
    %213 = vector.broadcast %212 : vector<1x32xf32> to vector<16x32xf32>
    %214 = arith.addf %210, %213 : vector<16x32xf32>
    %215 = arith.addf %214, %160 : vector<16x32xf32>
    %c1_102 = arith.constant 1 : index
    %c0_103 = arith.constant 0 : index
    %c0_104 = arith.constant 0 : index
    %216 = vector.load %arg9[%c1_102, %c0_103, %c0_104] : memref<2x1x32xf32, #tpu.memory_space<vmem>>, vector<1x1x32xf32>
    %217 = vector.shape_cast %216 : vector<1x1x32xf32> to vector<1x32xf32>
    %c1_105 = arith.constant 1 : index
    %c0_106 = arith.constant 0 : index
    %c0_107 = arith.constant 0 : index
    %218 = vector.load %arg10[%c1_105, %c0_106, %c0_107] : memref<2x1x32xf32, #tpu.memory_space<vmem>>, vector<1x1x32xf32>
    %219 = vector.shape_cast %218 : vector<1x1x32xf32> to vector<1x32xf32>
    %cst_108 = arith.constant dense<0.000000e+00> : vector<16xf32>
    %220 = vector.multi_reduction <add>, %215, %cst_108 [1] : vector<16x32xf32> to vector<16xf32>
    %221 = vector.shape_cast %220 : vector<16xf32> to vector<16x1xf32>
    %cst_109 = arith.constant 3.200000e+01 : f32
    %222 = vector.broadcast %cst_109 : f32 to vector<16x1xf32>
    %223 = arith.divf %221, %222 : vector<16x1xf32>
    %224 = vector.broadcast %223 : vector<16x1xf32> to vector<16x32xf32>
    %225 = arith.subf %215, %224 : vector<16x32xf32>
    %226 = arith.mulf %225, %225 : vector<16x32xf32>
    %cst_110 = arith.constant dense<0.000000e+00> : vector<16xf32>
    %227 = vector.multi_reduction <add>, %226, %cst_110 [1] : vector<16x32xf32> to vector<16xf32>
    %228 = vector.shape_cast %227 : vector<16xf32> to vector<16x1xf32>
    %cst_111 = arith.constant 3.200000e+01 : f32
    %229 = vector.broadcast %cst_111 : f32 to vector<16x1xf32>
    %230 = arith.divf %228, %229 : vector<16x1xf32>
    %231 = vector.broadcast %223 : vector<16x1xf32> to vector<16x32xf32>
    %232 = arith.subf %215, %231 : vector<16x32xf32>
    %cst_112 = arith.constant 9.99999996E-13 : f32
    %233 = vector.broadcast %cst_112 : f32 to vector<16x1xf32>
    %234 = arith.addf %230, %233 : vector<16x1xf32>
    %235 = math.rsqrt %234 : vector<16x1xf32>
    %236 = vector.broadcast %235 : vector<16x1xf32> to vector<16x32xf32>
    %237 = arith.mulf %232, %236 : vector<16x32xf32>
    %238 = vector.broadcast %217 : vector<1x32xf32> to vector<16x32xf32>
    %239 = arith.mulf %237, %238 : vector<16x32xf32>
    %240 = vector.broadcast %219 : vector<1x32xf32> to vector<16x32xf32>
    %241 = arith.addf %239, %240 : vector<16x32xf32>
    %c1_113 = arith.constant 1 : index
    %c0_114 = arith.constant 0 : index
    %c0_115 = arith.constant 0 : index
    %242 = vector.load %arg11[%c1_113, %c0_114, %c0_115] : memref<2x32x64xf32, #tpu.memory_space<vmem>>, vector<1x32x64xf32>
    %243 = vector.shape_cast %242 : vector<1x32x64xf32> to vector<32x64xf32>
    %cst_116 = arith.constant dense<0.000000e+00> : vector<16x64xf32>
    %244 = tpu.matmul %241, %243, %cst_116 {dimension_numbers = #tpu.dot_dimension_numbers<[1], [0], [0], [1], [0, 0, 1, 1], [], []>} : vector<16x32xf32>, vector<32x64xf32>, vector<16x64xf32> -> vector<16x64xf32>
    %c1_117 = arith.constant 1 : index
    %c0_118 = arith.constant 0 : index
    %c0_119 = arith.constant 0 : index
    %245 = vector.load %arg12[%c1_117, %c0_118, %c0_119] : memref<2x1x64xf32, #tpu.memory_space<vmem>>, vector<1x1x64xf32>
    %246 = vector.shape_cast %245 : vector<1x1x64xf32> to vector<1x64xf32>
    %247 = vector.broadcast %246 : vector<1x64xf32> to vector<16x64xf32>
    %248 = arith.addf %244, %247 : vector<16x64xf32>
    %249 = arith.mulf %248, %248 : vector<16x64xf32>
    %250 = arith.mulf %248, %249 : vector<16x64xf32>
    %cst_120 = arith.constant 4.471500e-02 : f32
    %251 = vector.broadcast %cst_120 : f32 to vector<16x64xf32>
    %252 = arith.mulf %251, %250 : vector<16x64xf32>
    %253 = arith.addf %248, %252 : vector<16x64xf32>
    %cst_121 = arith.constant 0.797884583 : f32
    %254 = vector.broadcast %cst_121 : f32 to vector<16x64xf32>
    %255 = arith.mulf %254, %253 : vector<16x64xf32>
    %256 = math.tanh %255 : vector<16x64xf32>
    %cst_122 = arith.constant 1.000000e+00 : f32
    %257 = vector.broadcast %cst_122 : f32 to vector<16x64xf32>
    %258 = arith.addf %257, %256 : vector<16x64xf32>
    %cst_123 = arith.constant 5.000000e-01 : f32
    %259 = vector.broadcast %cst_123 : f32 to vector<16x64xf32>
    %260 = arith.mulf %259, %258 : vector<16x64xf32>
    %261 = arith.mulf %248, %260 : vector<16x64xf32>
    %c1_124 = arith.constant 1 : index
    %c0_125 = arith.constant 0 : index
    %c0_126 = arith.constant 0 : index
    %262 = vector.load %arg13[%c1_124, %c0_125, %c0_126] : memref<2x64x32xf32, #tpu.memory_space<vmem>>, vector<1x64x32xf32>
    %263 = vector.shape_cast %262 : vector<1x64x32xf32> to vector<64x32xf32>
    %cst_127 = arith.constant dense<0.000000e+00> : vector<16x32xf32>
    %264 = tpu.matmul %261, %263, %cst_127 {dimension_numbers = #tpu.dot_dimension_numbers<[1], [0], [0], [1], [0, 0, 1, 1], [], []>} : vector<16x64xf32>, vector<64x32xf32>, vector<16x32xf32> -> vector<16x32xf32>
    %c1_128 = arith.constant 1 : index
    %c0_129 = arith.constant 0 : index
    %c0_130 = arith.constant 0 : index
    %265 = vector.load %arg14[%c1_128, %c0_129, %c0_130] : memref<2x1x32xf32, #tpu.memory_space<vmem>>, vector<1x1x32xf32>
    %266 = vector.shape_cast %265 : vector<1x1x32xf32> to vector<1x32xf32>
    %267 = vector.broadcast %266 : vector<1x32xf32> to vector<16x32xf32>
    %268 = arith.addf %264, %267 : vector<16x32xf32>
    %269 = arith.addf %268, %241 : vector<16x32xf32>
    %c1_131 = arith.constant 1 : index
    %c0_132 = arith.constant 0 : index
    %c0_133 = arith.constant 0 : index
    %270 = vector.load %arg15[%c1_131, %c0_132, %c0_133] : memref<2x1x32xf32, #tpu.memory_space<vmem>>, vector<1x1x32xf32>
    %271 = vector.shape_cast %270 : vector<1x1x32xf32> to vector<1x32xf32>
    %c1_134 = arith.constant 1 : index
    %c0_135 = arith.constant 0 : index
    %c0_136 = arith.constant 0 : index
    %272 = vector.load %arg16[%c1_134, %c0_135, %c0_136] : memref<2x1x32xf32, #tpu.memory_space<vmem>>, vector<1x1x32xf32>
    %273 = vector.shape_cast %272 : vector<1x1x32xf32> to vector<1x32xf32>
    %cst_137 = arith.constant dense<0.000000e+00> : vector<16xf32>
    %274 = vector.multi_reduction <add>, %269, %cst_137 [1] : vector<16x32xf32> to vector<16xf32>
    %275 = vector.shape_cast %274 : vector<16xf32> to vector<16x1xf32>
    %cst_138 = arith.constant 3.200000e+01 : f32
    %276 = vector.broadcast %cst_138 : f32 to vector<16x1xf32>
    %277 = arith.divf %275, %276 : vector<16x1xf32>
    %278 = vector.broadcast %277 : vector<16x1xf32> to vector<16x32xf32>
    %279 = arith.subf %269, %278 : vector<16x32xf32>
    %280 = arith.mulf %279, %279 : vector<16x32xf32>
    %cst_139 = arith.constant dense<0.000000e+00> : vector<16xf32>
    %281 = vector.multi_reduction <add>, %280, %cst_139 [1] : vector<16x32xf32> to vector<16xf32>
    %282 = vector.shape_cast %281 : vector<16xf32> to vector<16x1xf32>
    %cst_140 = arith.constant 3.200000e+01 : f32
    %283 = vector.broadcast %cst_140 : f32 to vector<16x1xf32>
    %284 = arith.divf %282, %283 : vector<16x1xf32>
    %285 = vector.broadcast %277 : vector<16x1xf32> to vector<16x32xf32>
    %286 = arith.subf %269, %285 : vector<16x32xf32>
    %cst_141 = arith.constant 9.99999996E-13 : f32
    %287 = vector.broadcast %cst_141 : f32 to vector<16x1xf32>
    %288 = arith.addf %284, %287 : vector<16x1xf32>
    %289 = math.rsqrt %288 : vector<16x1xf32>
    %290 = vector.broadcast %289 : vector<16x1xf32> to vector<16x32xf32>
    %291 = arith.mulf %286, %290 : vector<16x32xf32>
    %292 = vector.broadcast %271 : vector<1x32xf32> to vector<16x32xf32>
    %293 = arith.mulf %291, %292 : vector<16x32xf32>
    %294 = vector.broadcast %273 : vector<1x32xf32> to vector<16x32xf32>
    %295 = arith.addf %293, %294 : vector<16x32xf32>
    %c0_142 = arith.constant 0 : index
    %c0_143 = arith.constant 0 : index
    %296 = vector.load %arg17[%c0_142, %c0_143] : memref<32x24xf32, #tpu.memory_space<vmem>>, vector<32x24xf32>
    %cst_144 = arith.constant dense<0.000000e+00> : vector<16x24xf32>
    %297 = tpu.matmul %295, %296, %cst_144 {dimension_numbers = #tpu.dot_dimension_numbers<[1], [0], [0], [1], [0, 0, 1, 1], [], []>} : vector<16x32xf32>, vector<32x24xf32>, vector<16x24xf32> -> vector<16x24xf32>
    %c0_145 = arith.constant 0 : index
    %c0_146 = arith.constant 0 : index
    %298 = vector.load %arg18[%c0_145, %c0_146] : memref<1x24xf32, #tpu.memory_space<vmem>>, vector<1x24xf32>
    %299 = vector.broadcast %298 : vector<1x24xf32> to vector<16x24xf32>
    %300 = arith.addf %297, %299 : vector<16x24xf32>
    %c0_147 = arith.constant 0 : index
    %c0_148 = arith.constant 0 : index
    %301 = vector.load %arg19[%c0_147, %c0_148] : memref<16x24xf32, #tpu.memory_space<vmem>>, vector<16x24xf32>
    tpu.vector_store %arg19[%c0_147, %c0_148], %300 {strides = array<i32>} : memref<16x24xf32, #tpu.memory_space<vmem>>, vector<16x24xf32>,
    return
  }
  func.func @transform_0(%arg0: i32) -> (i32, i32) {
    %c0_i32 = arith.constant 0 : i32
    %c0_i32_0 = arith.constant 0 : i32
    %c0_i32_1 = arith.constant 0 : i32
    return %c0_i32, %c0_i32_0 : i32, i32
  }
  func.func @transform_1(%arg0: i32) -> (i32, i32) {
    %c0_i32 = arith.constant 0 : i32
    %c0_i32_0 = arith.constant 0 : i32
    %c0_i32_1 = arith.constant 0 : i32
    return %c0_i32, %c0_i32_0 : i32, i32
  }
  func.func @transform_2(%arg0: i32) -> (i32, i32) {
    %c0_i32 = arith.constant 0 : i32
    %c0_i32_0 = arith.constant 0 : i32
    %c0_i32_1 = arith.constant 0 : i32
    return %c0_i32, %c0_i32_0 : i32, i32
  }
  func.func @transform_3(%arg0: i32) -> (i32, i32) {
    %c0_i32 = arith.constant 0 : i32
    %c0_i32_0 = arith.constant 0 : i32
    %c0_i32_1 = arith.constant 0 : i32
    return %c0_i32, %c0_i32_0 : i32, i32
  }
  func.func @transform_4(%arg0: i32) -> (i32, i32, i32) {
    %c0_i32 = arith.constant 0 : i32
    %c0_i32_0 = arith.constant 0 : i32
    %c0_i32_1 = arith.constant 0 : i32
    %c0_i32_2 = arith.constant 0 : i32
    return %c0_i32, %c0_i32_0, %c0_i32_1 : i32, i32, i32
  }
  func.func @transform_5(%arg0: i32) -> (i32, i32, i32) {
    %c0_i32 = arith.constant 0 : i32
    %c0_i32_0 = arith.constant 0 : i32
    %c0_i32_1 = arith.constant 0 : i32
    %c0_i32_2 = arith.constant 0 : i32
    return %c0_i32, %c0_i32_0, %c0_i32_1 : i32, i32, i32
  }
  func.func @transform_6(%arg0: i32) -> (i32, i32, i32) {
    %c0_i32 = arith.constant 0 : i32
    %c0_i32_0 = arith.constant 0 : i32
    %c0_i32_1 = arith.constant 0 : i32
    %c0_i32_2 = arith.constant 0 : i32
    return %c0_i32, %c0_i32_0, %c0_i32_1 : i32, i32, i32
  }
  func.func @transform_7(%arg0: i32) -> (i32, i32, i32) {
    %c0_i32 = arith.constant 0 : i32
    %c0_i32_0 = arith.constant 0 : i32
    %c0_i32_1 = arith.constant 0 : i32
    %c0_i32_2 = arith.constant 0 : i32
    return %c0_i32, %c0_i32_0, %c0_i32_1 : i32, i32, i32
  }
  func.func @transform_8(%arg0: i32) -> (i32, i32, i32) {
    %c0_i32 = arith.constant 0 : i32
    %c0_i32_0 = arith.constant 0 : i32
    %c0_i32_1 = arith.constant 0 : i32
    %c0_i32_2 = arith.constant 0 : i32
    return %c0_i32, %c0_i32_0, %c0_i32_1 : i32, i32, i32
  }
  func.func @transform_9(%arg0: i32) -> (i32, i32, i32) {
    %c0_i32 = arith.constant 0 : i32
    %c0_i32_0 = arith.constant 0 : i32
    %c0_i32_1 = arith.constant 0 : i32
    %c0_i32_2 = arith.constant 0 : i32
    return %c0_i32, %c0_i32_0, %c0_i32_1 : i32, i32, i32
  }
  func.func @transform_10(%arg0: i32) -> (i32, i32, i32) {
    %c0_i32 = arith.constant 0 : i32
    %c0_i32_0 = arith.constant 0 : i32
    %c0_i32_1 = arith.constant 0 : i32
    %c0_i32_2 = arith.constant 0 : i32
    return %c0_i32, %c0_i32_0, %c0_i32_1 : i32, i32, i32
  }
  func.func @transform_11(%arg0: i32) -> (i32, i32, i32) {
    %c0_i32 = arith.constant 0 : i32
    %c0_i32_0 = arith.constant 0 : i32
    %c0_i32_1 = arith.constant 0 : i32
    %c0_i32_2 = arith.constant 0 : i32
    return %c0_i32, %c0_i32_0, %c0_i32_1 : i32, i32, i32
  }
  func.func @transform_12(%arg0: i32) -> (i32, i32, i32) {
    %c0_i32 = arith.constant 0 : i32
    %c0_i32_0 = arith.constant 0 : i32
    %c0_i32_1 = arith.constant 0 : i32
    %c0_i32_2 = arith.constant 0 : i32
    return %c0_i32, %c0_i32_0, %c0_i32_1 : i32, i32, i32
  }
  func.func @transform_13(%arg0: i32) -> (i32, i32, i32) {
    %c0_i32 = arith.constant 0 : i32
    %c0_i32_0 = arith.constant 0 : i32
    %c0_i32_1 = arith.constant 0 : i32
    %c0_i32_2 = arith.constant 0 : i32
    return %c0_i32, %c0_i32_0, %c0_i32_1 : i32, i32, i32
  }
  func.func @transform_14(%arg0: i32) -> (i32, i32, i32) {
    %c0_i32 = arith.constant 0 : i32
    %c0_i32_0 = arith.constant 0 : i32
    %c0_i32_1 = arith.constant 0 : i32
    %c0_i32_2 = arith.constant 0 : i32
    return %c0_i32, %c0_i32_0, %c0_i32_1 : i32, i32, i32
  }
  func.func @transform_15(%arg0: i32) -> (i32, i32, i32) {
    %c0_i32 = arith.constant 0 : i32
    %c0_i32_0 = arith.constant 0 : i32
    %c0_i32_1 = arith.constant 0 : i32
    %c0_i32_2 = arith.constant 0 : i32
    return %c0_i32, %c0_i32_0, %c0_i32_1 : i32, i32, i32
  }
  func.func @transform_16(%arg0: i32) -> (i32, i32) {
    %c0_i32 = arith.constant 0 : i32
    %c0_i32_0 = arith.constant 0 : i32
    %c0_i32_1 = arith.constant 0 : i32
    return %c0_i32, %c0_i32_0 : i32, i32
  }
  func.func @transform_17(%arg0: i32) -> (i32, i32) {
    %c0_i32 = arith.constant 0 : i32
    %c0_i32_0 = arith.constant 0 : i32
    %c0_i32_1 = arith.constant 0 : i32
    return %c0_i32, %c0_i32_0 : i32, i32
  }
  func.func @transform_18(%arg0: i32) -> (i32, i32) {
    %c0_i32 = arith.constant 0 : i32
    %c0_i32_0 = arith.constant 0 : i32
    %c0_i32_1 = arith.constant 0 : i32
    return %c0_i32, %c0_i32_0 : i32, i32
  }
}

</mosaic_0001>

<llo_original>
// kernel: mtrefine_forward.1
$region0: #{mtrefine_forward.1}
  #allocation0 [shape = 'u32[]', space=smem, size = 0x4, offset = 0x4, fixed_abs, tag = 'smem constant byte address 0x4 - core index']
  #allocation1 [shape = 'u32[72,128]{1,0:T(1,128)}', space=vmem, size = 0x9000, scoped, tag = 'internal scratch']
  %s0 = inlined_call_operand.vmem [shape: f32[16,32], index: 0, kind: input, shape index: {}]
  %s1 = inlined_call_operand.vmem [shape: f32[16,16], index: 1, kind: input, shape index: {}]
  %s2 = inlined_call_operand.vmem [shape: f32[1,32], index: 2, kind: input, shape index: {}]
  %s3 = inlined_call_operand.vmem [shape: f32[1,32], index: 3, kind: input, shape index: {}]
  %s4 = inlined_call_operand.vmem [shape: f32[2,32,96], index: 4, kind: input, shape index: {}]
  %s5 = inlined_call_operand.vmem [shape: f32[2,1,96], index: 5, kind: input, shape index: {}]
  %s6 = inlined_call_operand.vmem [shape: f32[2,32,32], index: 6, kind: input, shape index: {}]
  %s7 = inlined_call_operand.vmem [shape: f32[2,1,32], index: 7, kind: input, shape index: {}]
  %s8 = inlined_call_operand.vmem [shape: f32[2,1,32], index: 8, kind: input, shape index: {}]
  %s9 = inlined_call_operand.vmem [shape: f32[2,1,32], index: 9, kind: input, shape index: {}]
  %s10 = inlined_call_operand.vmem [shape: f32[2,32,64], index: 10, kind: input, shape index: {}]
  %s11 = inlined_call_operand.vmem [shape: f32[2,1,64], index: 11, kind: input, shape index: {}]
  %s12 = inlined_call_operand.vmem [shape: f32[2,64,32], index: 12, kind: input, shape index: {}]
  %s13 = inlined_call_operand.vmem [shape: f32[2,1,32], index: 13, kind: input, shape index: {}]
  %s14 = inlined_call_operand.vmem [shape: f32[2,1,32], index: 14, kind: input, shape index: {}]
  %s15 = inlined_call_operand.vmem [shape: f32[2,1,32], index: 15, kind: input, shape index: {}]
  %s16 = inlined_call_operand.vmem [shape: f32[32,24], index: 16, kind: input, shape index: {}]
  %s17 = inlined_call_operand.vmem [shape: f32[1,24], index: 17, kind: input, shape index: {}]
  %s18 = inlined_call_operand.vmem [shape: f32[16,24], index: 18, kind: output, shape index: {}]
  %s19 = sld [smem:[#allocation0]]
  $region82: #{mtrefine_forward.1} parent=0
    _
  %s21 = ssub.s32 1, %s19
  %s22 = scalar_select 0, %s21, %s19
  // Predicated region
  $region2: #{mtrefine_forward.1} parent=0 // pred_check
    _
  $region3: #{mtrefine_forward.1} parent=0 // pred_check_branch
    %24 = sbr.rel (0) target = $region5
  $region4: #{mtrefine_forward.1} parent=0 // pred_region
    _
  $region5: #{mtrefine_forward.1} parent=0 // pred_fallthru
    _
  // Predicated region
  $region6: #{mtrefine_forward.1} parent=0 // pred_check
    _
  $region7: #{mtrefine_forward.1} parent=0 // pred_check_branch
    %26 = sbr.rel (0) target = $region9
  $region8: #{mtrefine_forward.1} parent=0 // pred_region
    _
  $region9: #{mtrefine_forward.1} parent=0 // pred_fallthru
    _
  // Predicated region
  $region10: #{mtrefine_forward.1} parent=0 // pred_check
    _
  $region11: #{mtrefine_forward.1} parent=0 // pred_check_branch
    %28 = sbr.rel (0) target = $region13
  $region12: #{mtrefine_forward.1} parent=0 // pred_region
    _
  $region13: #{mtrefine_forward.1} parent=0 // pred_fallthru
    _
  // Predicated region
  $region14: #{mtrefine_forward.1} parent=0 // pred_check
    _
  $region15: #{mtrefine_forward.1} parent=0 // pred_check_branch
    %30 = sbr.rel (0) target = $region17
  $region16: #{mtrefine_forward.1} parent=0 // pred_region
    _
  $region17: #{mtrefine_forward.1} parent=0 // pred_fallthru
    _
  // Predicated region
  $region18: #{mtrefine_forward.1} parent=0 // pred_check
    _
  $region19: #{mtrefine_forward.1} parent=0 // pred_check_branch
    %32 = sbr.rel (0) target = $region21
  $region20: #{mtrefine_forward.1} parent=0 // pred_region
    _
  $region21: #{mtrefine_forward.1} parent=0 // pred_fallthru
    _
  // Predicated region
  $region22: #{mtrefine_forward.1} parent=0 // pred_check
    _
  $region23: #{mtrefine_forward.1} parent=0 // pred_check_branch
    %34 = sbr.rel (0) target = $region25
  $region24: #{mtrefine_forward.1} parent=0 // pred_region
    _
  $region25: #{mtrefine_forward.1} parent=0 // pred_fallthru
    _
  // Predicated region
  $region26: #{mtrefine_forward.1} parent=0 // pred_check
    _
  $region27: #{mtrefine_forward.1} parent=0 // pred_check_branch
    %36 = sbr.rel (0) target = $region29
  $region28: #{mtrefine_forward.1} parent=0 // pred_region
    _
  $region29: #{mtrefine_forward.1} parent=0 // pred_fallthru
    _
  // Predicated region
  $region30: #{mtrefine_forward.1} parent=0 // pred_check
    _
  $region31: #{mtrefine_forward.1} parent=0 // pred_check_branch
    %38 = sbr.rel (0) target = $region33
  $region32: #{mtrefine_forward.1} parent=0 // pred_region
    _
  $region33: #{mtrefine_forward.1} parent=0 // pred_fallthru
    _
  // Predicated region
  $region34: #{mtrefine_forward.1} parent=0 // pred_check
    _
  $region35: #{mtrefine_forward.1} parent=0 // pred_check_branch
    %40 = sbr.rel (0) target = $region37
  $region36: #{mtrefine_forward.1} parent=0 // pred_region
    _
  $region37: #{mtrefine_forward.1} parent=0 // pred_fallthru
    _
  // Predicated region
  $region38: #{mtrefine_forward.1} parent=0 // pred_check
    _
  $region39: #{mtrefine_forward.1} parent=0 // pred_check_branch
    %42 = sbr.rel (0) target = $region41
  $region40: #{mtrefine_forward.1} parent=0 // pred_region
    _
  $region41: #{mtrefine_forward.1} parent=0 // pred_fallthru
    _
  // Predicated region
  $region42: #{mtrefine_forward.1} parent=0 // pred_check
    _
  $region43: #{mtrefine_forward.1} parent=0 // pred_check_branch
    %44 = sbr.rel (0) target = $region45
  $region44: #{mtrefine_forward.1} parent=0 // pred_region
    _
  $region45: #{mtrefine_forward.1} parent=0 // pred_fallthru
    _
  // Predicated region
  $region46: #{mtrefine_forward.1} parent=0 // pred_check
    _
  $region47: #{mtrefine_forward.1} parent=0 // pred_check_branch
    %46 = sbr.rel (0) target = $region49
  $region48: #{mtrefine_forward.1} parent=0 // pred_region
    _
  $region49: #{mtrefine_forward.1} parent=0 // pred_fallthru
    _
  // Predicated region
  $region50: #{mtrefine_forward.1} parent=0 // pred_check
    _
  $region51: #{mtrefine_forward.1} parent=0 // pred_check_branch
    %48 = sbr.rel (0) target = $region53
  $region52: #{mtrefine_forward.1} parent=0 // pred_region
    _
  $region53: #{mtrefine_forward.1} parent=0 // pred_fallthru
    _
  // Predicated region
  $region54: #{mtrefine_forward.1} parent=0 // pred_check
    _
  $region55: #{mtrefine_forward.1} parent=0 // pred_check_branch
    %50 = sbr.rel (0) target = $region57
  $region56: #{mtrefine_forward.1} parent=0 // pred_region
    _
  $region57: #{mtrefine_forward.1} parent=0 // pred_fallthru
    _
  // Predicated region
  $region58: #{mtrefine_forward.1} parent=0 // pred_check
    _
  $region59: #{mtrefine_forward.1} parent=0 // pred_check_branch
    %52 = sbr.rel (0) target = $region61
  $region60: #{mtrefine_forward.1} parent=0 // pred_region
    _
  $region61: #{mtrefine_forward.1} parent=0 // pred_fallthru
    _
  // Predicated region
  $region62: #{mtrefine_forward.1} parent=0 // pred_check
    _
  $region63: #{mtrefine_forward.1} parent=0 // pred_check_branch
    %54 = sbr.rel (0) target = $region65
  $region64: #{mtrefine_forward.1} parent=0 // pred_region
    _
  $region65: #{mtrefine_forward.1} parent=0 // pred_fallthru
    _
  // Predicated region
  $region66: #{mtrefine_forward.1} parent=0 // pred_check
    _
  $region67: #{mtrefine_forward.1} parent=0 // pred_check_branch
    %56 = sbr.rel (0) target = $region69
  $region68: #{mtrefine_forward.1} parent=0 // pred_region
    _
  $region69: #{mtrefine_forward.1} parent=0 // pred_fallthru
    _
  // Predicated region
  $region70: #{mtrefine_forward.1} parent=0 // pred_check
    _
  $region71: #{mtrefine_forward.1} parent=0 // pred_check_branch
    %58 = sbr.rel (0) target = $region73
  $region72: #{mtrefine_forward.1} parent=0 // pred_region
    _
  $region73: #{mtrefine_forward.1} parent=0 // pred_fallthru
    _
  %v59 = vld [vmem:[%s0] sm:$0xff]
  %v60 = vld [vmem:[%s0 + $0x8] sm:$0xff]
  %v61 = vld [vmem:[%s2] sm:$0x1]
  %v62 = vld [vmem:[%s3] sm:$0x1]
  %vm63 = vcmask 261120
  %v64 = vsel %vm63, %v59, 0.0
  %65 = vadd.xlane.f32.xlu0 %v64
  %v66 = vpop.xlane.xlu0 %65
  %v67 = vsel %vm63, %v60, 0.0
  %68 = vadd.xlane.f32.xlu0 %v67
  %v69 = vpop.xlane.xlu0 %68
  %v70 = vrcp.pop 32.0
  %v71 = vmul.f32 32.0, %v70
  %v72 = vsub.f32 1.0, %v71
  %v73 = vmul.f32 %v70, %v72
  %v74 = vadd.f32 %v70, %v73
  %vm75 = vweird.f32 %v70
  %v76 = vsel %vm75, %v70, %v74
  %v77 = vmul.f32 %v66, %v76
  %v78 = vmul.f32 %v69, %v76
  %v79 = vsub.f32 %v59, %v77
  %v80 = vsub.f32 %v60, %v78
  %v81 = vmul.f32 %v79, %v79
  %v82 = vmul.f32 %v80, %v80
  %v83 = vsel %vm63, %v81, 0.0
  %84 = vadd.xlane.f32.xlu0 %v83
  %v85 = vpop.xlane.xlu0 %84
  %v86 = vsel %vm63, %v82, 0.0
  %87 = vadd.xlane.f32.xlu0 %v86
  %v88 = vpop.xlane.xlu0 %87
  %v89 = vmul.f32 %v85, %v76
  %v90 = vmul.f32 %v88, %v76
  %v91 = vadd.f32 %v89, 1e-12
  %v92 = vadd.f32 %v90, 1e-12
  %v93 = vrsqrt.pop %v91
  %v94 = vmul.f32 %v93, %v91
  %v95 = vmul.f32 %v94, %v93
  %v96 = vmul.f32 0.5, %v95
  %v97 = vsub.f32 1.5, %v96
  %v98 = vmul.f32 %v93, %v97
  %vm99 = vweird.f32 %v91
  %vm100 = vweird.f32 %v93
  %vm101 = vmor %vm99, %vm100
  %v102 = vsel %vm101, %v93, %v98
  %v103 = vrsqrt.pop %v92
  %v104 = vmul.f32 %v103, %v92
  %v105 = vmul.f32 %v104, %v103
  %v106 = vmul.f32 0.5, %v105
  %v107 = vsub.f32 1.5, %v106
  %v108 = vmul.f32 %v103, %v107
  %vm109 = vweird.f32 %v92
  %vm110 = vweird.f32 %v103
  %vm111 = vmor %vm109, %vm110
  %v112 = vsel %vm111, %v103, %v108
  %v113 = vmul.f32 %v79, %v102
  %v114 = vmul.f32 %v80, %v112
  %v116 = vperm.slane %v61, 0
  %v118 = vmul.f32 %v113, %v116
  %v119 = vmul.f32 %v114, %v116
  %v121 = vperm.slane %v62, 0
  %v123 = vadd.f32 %v118, %v121
  %v124 = vadd.f32 %v119, %v121
  %v125 = vld [vmem:[%s1] sm:$0xff]
  %v126 = vld [vmem:[%s1 + $0x8] sm:$0xff]
  %v127 = vld [vmem:[%s4] sm:$0xff]
  %v128 = vld [vmem:[%s4 + $0x8] sm:$0xff]
  %v129 = vld [vmem:[%s4 + $0x10] sm:$0xff]
  %v130 = vld [vmem:[%s4 + $0x18] sm:$0xff]
  %v131 = vld [vmem:[%s5] sm:$0x1]
  %v133 = vperm.slane %v131, 0
  %v136 = vsel %vm63, %v123, 0
  %v139 = vsel %vm63, %v124, 0
  %141 = vmatpush.msra.mxu0 0.0
  %142 = vmatpush.msra.mxu0 0.0
  %143 = vmatpush.msra.mxu0 0.0
  %144 = vmatpush.msra.mxu0 0.0
  %145 = vmatpush.msra.mxu0 0.0
  %146 = vmatpush.msra.mxu0 0.0
  %147 = vmatpush.msra.mxu0 0.0
  %148 = vmatpush.msra.mxu0 0.0
  %149 = vmatpush.msra.mxu0 0.0
  %150 = vmatpush.msra.mxu0 0.0
  %151 = vmatpush.msra.mxu0 0.0
  %152 = vmatpush.msra.mxu0 0.0
  %153 = vmatpush.msra.mxu0 %v130
  %154 = vmatpush.msra.mxu0 %v129
  %155 = vmatpush.msra.mxu0 %v128
  %156 = vmatpush.msra.mxu0 %v127
  %157 = vmatmul.f32.gmra.mxu0 %v136
  %v158 = vpop.f32.mrf.mxu0
  %v159 = vadd.f32 %v133, %v158
  %160 = vmatmul.f32.gmra.mxu0 %v139
  %v161 = vpop.f32.mrf.mxu0
  %v162 = vadd.f32 %v133, %v161
  %163 = vdwg.mxu0
  %v164 = vld [vmem:[%s6] sm:$0xff]
  %v165 = vld [vmem:[%s6 + $0x8] sm:$0xff]
  %v166 = vld [vmem:[%s6 + $0x10] sm:$0xff]
  %v167 = vld [vmem:[%s6 + $0x18] sm:$0xff]
  %170 = vrot.lane.b32.xlu0 %v159, 96
  %v171 = vpop.permute.xlu0 %170
  %172 = vrot.lane.b32.xlu0 %v162, 96
  %v173 = vpop.permute.xlu0 %172
  %vm174 = vcmask 130048
  %v175 = vsel %vm174, %v159, 0
  %v177 = vsel %vm174, %v162, 0
  %v179 = vsel %vm174, %v171, 0
  %v181 = vsel %vm174, %v173, 0
  %183 = vmatpush.xpose.msra.mxu0 0.0
  %184 = vmatpush.xpose.msra.mxu0 0.0
  %185 = vmatpush.xpose.msra.mxu0 0.0
  %186 = vmatpush.xpose.msra.mxu0 0.0
  %187 = vmatpush.xpose.msra.mxu0 0.0
  %188 = vmatpush.xpose.msra.mxu0 0.0
  %189 = vmatpush.xpose.msra.mxu0 0.0
  %190 = vmatpush.xpose.msra.mxu0 0.0
  %191 = vmatpush.xpose.msra.mxu0 0.0
  %192 = vmatpush.xpose.msra.mxu0 0.0
  %193 = vmatpush.xpose.msra.mxu0 0.0
  %194 = vmatpush.xpose.msra.mxu0 0.0
  %195 = vmatpush.xpose.msra.mxu0 0.0
  %196 = vmatpush.xpose.msra.mxu0 0.0
  %197 = vmatpush.xpose.msra.mxu0 %v181
  %198 = vmatpush.xpose.msra.mxu0 %v179
  %199 = vmatmul.f32.gmra.mxu0 %v175
  %v200 = vpop.f32.mrf.mxu0
  %v201 = vadd.f32 0.0, %v200
  %202 = vmatmul.f32.gmra.mxu0 %v177
  %v203 = vpop.f32.mrf.mxu0
  %v204 = vadd.f32 0.0, %v203
  %205 = vdwg.mxu0
  %v206 = vmul.f32 %v201, 0.25
  %v207 = vmul.f32 %v204, 0.25
  %v208 = vadd.f32 %v206, %v125
  %v209 = vadd.f32 %v207, %v126
  %v210 = vsel %vm174, %v208, -inf
  %211 = vmax.xlane.f32.xlu0 %v210
  %v212 = vpop.xlane.xlu0 %211
  %v213 = vsel %vm174, %v209, -inf
  %214 = vmax.xlane.f32.xlu0 %v213
  %v215 = vpop.xlane.xlu0 %214
  %v216 = vsub.f32 %v208, %v212
  %v217 = vsub.f32 %v209, %v215
  %v218 = vmul.f32 %v216, 1.442695
  %v219 = vpow.pop %v218
  %v220 = vmul.f32 %v217, 1.442695
  %v221 = vpow.pop %v220
  %v222 = vsel %vm174, %v219, 0.0
  %223 = vadd.xlane.f32.xlu0 %v222
  %v224 = vpop.xlane.xlu0 %223
  %v225 = vsel %vm174, %v221, 0.0
  %226 = vadd.xlane.f32.xlu0 %v225
  %v227 = vpop.xlane.xlu0 %226
  %v228 = vrcp.pop %v224
  %v229 = vmul.f32 %v224, %v228
  %v230 = vsub.f32 1.0, %v229
  %v231 = vmul.f32 %v228, %v230
  %v232 = vadd.f32 %v228, %v231
  %vm233 = vweird.f32 %v224
  %vm234 = vweird.f32 %v228
  %vm235 = vmor %vm233, %vm234
  %v236 = vsel %vm235, %v228, %v232
  %v237 = vand.u32 2147483647, %v224
  %vm238 = vcmp.eq.f32.partialorder %v237, 8.507059e+37
  %v239 = vand.u32 %v224, 2147483648
  %v240 = vor.u32 1.1754944e-38, %v239
  %v241 = vsel %vm238, %v240, %v236
  %v242 = vmul.f32 %v219, %v241
  %v243 = vrcp.pop %v227
  %v244 = vmul.f32 %v227, %v243
  %v245 = vsub.f32 1.0, %v244
  %v246 = vmul.f32 %v243, %v245
  %v247 = vadd.f32 %v243, %v246
  %vm248 = vweird.f32 %v227
  %vm249 = vweird.f32 %v243
  %vm250 = vmor %vm248, %vm249
  %v251 = vsel %vm250, %v243, %v247
  %v252 = vand.u32 2147483647, %v227
  %vm253 = vcmp.eq.f32.partialorder %v252, 8.507059e+37
  %v254 = vand.u32 %v227, 2147483648
  %v255 = vor.u32 1.1754944e-38, %v254
  %v256 = vsel %vm253, %v255, %v251
  %v257 = vmul.f32 %v221, %v256
  %258 = vrot.lane.b32.xlu0 %v159, 64
  %v259 = vpop.permute.xlu0 %258
  %260 = vrot.lane.b32.xlu0 %v162, 64
  %v261 = vpop.permute.xlu0 %260
  %v265 = vsel %vm174, %v242, 0
  %v268 = vsel %vm174, %v257, 0
  %270 = vmatpush.msra.mxu0 0.0
  %271 = vmatpush.msra.mxu0 0.0
  %272 = vmatpush.msra.mxu0 0.0
  %273 = vmatpush.msra.mxu0 0.0
  %274 = vmatpush.msra.mxu0 0.0
  %275 = vmatpush.msra.mxu0 0.0
  %276 = vmatpush.msra.mxu0 0.0
  %277 = vmatpush.msra.mxu0 0.0
  %278 = vmatpush.msra.mxu0 0.0
  %279 = vmatpush.msra.mxu0 0.0
  %280 = vmatpush.msra.mxu0 0.0
  %281 = vmatpush.msra.mxu0 0.0
  %282 = vmatpush.msra.mxu0 0.0
  %283 = vmatpush.msra.mxu0 0.0
  %284 = vmatpush.msra.mxu0 %v261
  %285 = vmatpush.msra.mxu0 %v259
  %286 = vmatmul.f32.gmra.mxu0 %v265
  %v287 = vpop.f32.mrf.mxu0
  %v288 = vadd.f32 0.0, %v287
  %289 = vmatmul.f32.gmra.mxu0 %v268
  %v290 = vpop.f32.mrf.mxu0
  %v291 = vadd.f32 0.0, %v290
  %292 = vdwg.mxu0
  %293 = vrot.lane.b32.xlu0 %v159, 112
  %v294 = vpop.permute.xlu0 %293
  %295 = vrot.lane.b32.xlu0 %v162, 112
  %v296 = vpop.permute.xlu0 %295
  %297 = vrot.lane.b32.xlu0 %v159, 80
  %v298 = vpop.permute.xlu0 %297
  %299 = vrot.lane.b32.xlu0 %v162, 80
  %v300 = vpop.permute.xlu0 %299
  %v301 = vsel %vm174, %v294, 0
  %v303 = vsel %vm174, %v296, 0
  %v305 = vsel %vm174, %v298, 0
  %v307 = vsel %vm174, %v300, 0
  %309 = vmatpush.xpose.msra.mxu0 0.0
  %310 = vmatpush.xpose.msra.mxu0 0.0
  %311 = vmatpush.xpose.msra.mxu0 0.0
  %312 = vmatpush.xpose.msra.mxu0 0.0
  %313 = vmatpush.xpose.msra.mxu0 0.0
  %314 = vmatpush.xpose.msra.mxu0 0.0
  %315 = vmatpush.xpose.msra.mxu0 0.0
  %316 = vmatpush.xpose.msra.mxu0 0.0
  %317 = vmatpush.xpose.msra.mxu0 0.0
  %318 = vmatpush.xpose.msra.mxu0 0.0
  %319 = vmatpush.xpose.msra.mxu0 0.0
  %320 = vmatpush.xpose.msra.mxu0 0.0
  %321 = vmatpush.xpose.msra.mxu0 0.0
  %322 = vmatpush.xpose.msra.mxu0 0.0
  %323 = vmatpush.xpose.msra.mxu0 %v307
  %324 = vmatpush.xpose.msra.mxu0 %v305
  %325 = vmatmul.f32.gmra.mxu0 %v301
  %v326 = vpop.f32.mrf.mxu0
  %v327 = vadd.f32 0.0, %v326
  %328 = vmatmul.f32.gmra.mxu0 %v303
  %v329 = vpop.f32.mrf.mxu0
  %v330 = vadd.f32 0.0, %v329
  %331 = vdwg.mxu0
  %v332 = vmul.f32 %v327, 0.25
  %v333 = vmul.f32 %v330, 0.25
  %v334 = vadd.f32 %v332, %v125
  %v335 = vadd.f32 %v333, %v126
  %v336 = vsel %vm174, %v334, -inf
  %337 = vmax.xlane.f32.xlu0 %v336
  %v338 = vpop.xlane.xlu0 %337
  %v339 = vsel %vm174, %v335, -inf
  %340 = vmax.xlane.f32.xlu0 %v339
  %v341 = vpop.xlane.xlu0 %340
  %v342 = vsub.f32 %v334, %v338
  %v343 = vsub.f32 %v335, %v341
  %v344 = vmul.f32 %v342, 1.442695
  %v345 = vpow.pop %v344
  %v346 = vmul.f32 %v343, 1.442695
  %v347 = vpow.pop %v346
  %v348 = vsel %vm174, %v345, 0.0
  %349 = vadd.xlane.f32.xlu0 %v348
  %v350 = vpop.xlane.xlu0 %349
  %v351 = vsel %vm174, %v347, 0.0
  %352 = vadd.xlane.f32.xlu0 %v351
  %v353 = vpop.xlane.xlu0 %352
  %v354 = vrcp.pop %v350
  %v355 = vmul.f32 %v350, %v354
  %v356 = vsub.f32 1.0, %v355
  %v357 = vmul.f32 %v354, %v356
  %v358 = vadd.f32 %v354, %v357
  %vm359 = vweird.f32 %v350
  %vm360 = vweird.f32 %v354
  %vm361 = vmor %vm359, %vm360
  %v362 = vsel %vm361, %v354, %v358
  %v363 = vand.u32 2147483647, %v350
  %vm364 = vcmp.eq.f32.partialorder %v363, 8.507059e+37
  %v365 = vand.u32 %v350, 2147483648
  %v366 = vor.u32 1.1754944e-38, %v365
  %v367 = vsel %vm364, %v366, %v362
  %v368 = vmul.f32 %v345, %v367
  %v369 = vrcp.pop %v353
  %v370 = vmul.f32 %v353, %v369
  %v371 = vsub.f32 1.0, %v370
  %v372 = vmul.f32 %v369, %v371
  %v373 = vadd.f32 %v369, %v372
  %vm374 = vweird.f32 %v353
  %vm375 = vweird.f32 %v369
  %vm376 = vmor %vm374, %vm375
  %v377 = vsel %vm376, %v369, %v373
  %v378 = vand.u32 2147483647, %v353
  %vm379 = vcmp.eq.f32.partialorder %v378, 8.507059e+37
  %v380 = vand.u32 %v353, 2147483648
  %v381 = vor.u32 1.1754944e-38, %v380
  %v382 = vsel %vm379, %v381, %v377
  %v383 = vmul.f32 %v347, %v382
  %384 = vrot.lane.b32.xlu0 %v159, 48
  %v385 = vpop.permute.xlu0 %384
  %386 = vrot.lane.b32.xlu0 %v162, 48
  %v387 = vpop.permute.xlu0 %386
  %v391 = vsel %vm174, %v368, 0
  %v394 = vsel %vm174, %v383, 0
  %396 = vmatpush.msra.mxu0 0.0
  %397 = vmatpush.msra.mxu0 0.0
  %398 = vmatpush.msra.mxu0 0.0
  %399 = vmatpush.msra.mxu0 0.0
  %400 = vmatpush.msra.mxu0 0.0
  %401 = vmatpush.msra.mxu0 0.0
  %402 = vmatpush.msra.mxu0 0.0
  %403 = vmatpush.msra.mxu0 0.0
  %404 = vmatpush.msra.mxu0 0.0
  %405 = vmatpush.msra.mxu0 0.0
  %406 = vmatpush.msra.mxu0 0.0
  %407 = vmatpush.msra.mxu0 0.0
  %408 = vmatpush.msra.mxu0 0.0
  %409 = vmatpush.msra.mxu0 0.0
  %410 = vmatpush.msra.mxu0 %v387
  %411 = vmatpush.msra.mxu0 %v385
  %412 = vmatmul.f32.gmra.mxu0 %v391
  %v413 = vpop.f32.mrf.mxu0
  %v414 = vadd.f32 0.0, %v413
  %415 = vmatmul.f32.gmra.mxu0 %v394
  %v416 = vpop.f32.mrf.mxu0
  %v417 = vadd.f32 0.0, %v416
  %418 = vdwg.mxu0
  %v420 = vsel %vm174, %v414, 0
  %v423 = vsel %vm174, %v417, 0
  %425 = vmatpush.msra.mxu0 0.0
  %426 = vmatpush.msra.mxu0 0.0
  %427 = vmatpush.msra.mxu0 0.0
  %428 = vmatpush.msra.mxu0 0.0
  %429 = vmatpush.msra.mxu0 0.0
  %430 = vmatpush.msra.mxu0 0.0
  %431 = vmatpush.msra.mxu0 0.0
  %432 = vmatpush.msra.mxu0 0.0
  %433 = vmatpush.msra.mxu0 0.0
  %434 = vmatpush.msra.mxu0 0.0
  %435 = vmatpush.msra.mxu0 0.0
  %436 = vmatpush.msra.mxu0 0.0
  %437 = vmatpush.msra.mxu0 0.0
  %438 = vmatpush.msra.mxu0 0.0
  %439 = vmatpush.msra.mxu0 %v167
  %440 = vmatpush.msra.mxu0 %v166
  %441 = vmatmul.f32.gmra.mxu0 %v420
  %v442 = vpop.f32.mrf.mxu0
  %v443 = vadd.f32 0.0, %v442
  %444 = vmatmul.f32.gmra.mxu0 %v423
  %v445 = vpop.f32.mrf.mxu0
  %v446 = vadd.f32 0.0, %v445
  %447 = vdwg.mxu0
  %v449 = vsel %vm174, %v288, 0
  %v452 = vsel %vm174, %v291, 0
  %454 = vmatpush.msra.mxu0 0.0
  %455 = vmatpush.msra.mxu0 0.0
  %456 = vmatpush.msra.mxu0 0.0
  %457 = vmatpush.msra.mxu0 0.0
  %458 = vmatpush.msra.mxu0 0.0
  %459 = vmatpush.msra.mxu0 0.0
  %460 = vmatpush.msra.mxu0 0.0
  %461 = vmatpush.msra.mxu0 0.0
  %462 = vmatpush.msra.mxu0 0.0
  %463 = vmatpush.msra.mxu0 0.0
  %464 = vmatpush.msra.mxu0 0.0
  %465 = vmatpush.msra.mxu0 0.0
  %466 = vmatpush.msra.mxu0 0.0
  %467 = vmatpush.msra.mxu0 0.0
  %468 = vmatpush.msra.mxu0 %v165
  %469 = vmatpush.msra.mxu0 %v164
  %470 = vmatmul.f32.gmra.mxu0 %v449
  %v471 = vpop.f32.mrf.mxu0
  %v472 = vadd.f32 %v443, %v471
  %473 = vmatmul.f32.gmra.mxu0 %v452
  %v474 = vpop.f32.mrf.mxu0
  %v475 = vadd.f32 %v446, %v474
  %476 = vdwg.mxu0
  %v477 = vld [vmem:[%s7] sm:$0x1]
  %v479 = vperm.slane %v477, 0
  %v481 = vadd.f32 %v472, %v479
  %v482 = vadd.f32 %v475, %v479
  %v483 = vadd.f32 %v481, %v123
  %v484 = vadd.f32 %v482, %v124
  %v485 = vld [vmem:[%s8] sm:$0x1]
  %v486 = vld [vmem:[%s9] sm:$0x1]
  %v487 = vsel %vm63, %v483, 0.0
  %488 = vadd.xlane.f32.xlu0 %v487
  %v489 = vpop.xlane.xlu0 %488
  %v490 = vsel %vm63, %v484, 0.0
  %491 = vadd.xlane.f32.xlu0 %v490
  %v492 = vpop.xlane.xlu0 %491
  %v493 = vmul.f32 %v489, %v76
  %v494 = vmul.f32 %v492, %v76
  %v495 = vsub.f32 %v483, %v493
  %v496 = vsub.f32 %v484, %v494
  %v497 = vmul.f32 %v495, %v495
  %v498 = vmul.f32 %v496, %v496
  %v499 = vsel %vm63, %v497, 0.0
  %500 = vadd.xlane.f32.xlu0 %v499
  %v501 = vpop.xlane.xlu0 %500
  %v502 = vsel %vm63, %v498, 0.0
  %503 = vadd.xlane.f32.xlu0 %v502
  %v504 = vpop.xlane.xlu0 %503
  %v505 = vmul.f32 %v501, %v76
  %v506 = vmul.f32 %v504, %v76
  %v507 = vadd.f32 %v505, 1e-12
  %v508 = vadd.f32 %v506, 1e-12
  %v509 = vrsqrt.pop %v507
  %v510 = vmul.f32 %v509, %v507
  %v511 = vmul.f32 %v510, %v509
  %v512 = vmul.f32 0.5, %v511
  %v513 = vsub.f32 1.5, %v512
  %v514 = vmul.f32 %v509, %v513
  %vm515 = vweird.f32 %v507
  %vm516 = vweird.f32 %v509
  %vm517 = vmor %vm515, %vm516
  %v518 = vsel %vm517, %v509, %v514
  %v519 = vrsqrt.pop %v508
  %v520 = vmul.f32 %v519, %v508
  %v521 = vmul.f32 %v520, %v519
  %v522 = vmul.f32 0.5, %v521
  %v523 = vsub.f32 1.5, %v522
  %v524 = vmul.f32 %v519, %v523
  %vm525 = vweird.f32 %v508
  %vm526 = vweird.f32 %v519
  %vm527 = vmor %vm525, %vm526
  %v528 = vsel %vm527, %v519, %v524
  %v529 = vmul.f32 %v495, %v518
  %v530 = vmul.f32 %v496, %v528
  %v532 = vperm.slane %v485, 0
  %v534 = vmul.f32 %v529, %v532
  %v535 = vmul.f32 %v530, %v532
  %v537 = vperm.slane %v486, 0
  %v539 = vadd.f32 %v534, %v537
  %v540 = vadd.f32 %v535, %v537
  %v541 = vld [vmem:[%s10] sm:$0xff]
  %v542 = vld [vmem:[%s10 + $0x8] sm:$0xff]
  %v543 = vld [vmem:[%s10 + $0x10] sm:$0xff]
  %v544 = vld [vmem:[%s10 + $0x18] sm:$0xff]
  %v545 = vld [vmem:[%s11] sm:$0x1]
  %v547 = vperm.slane %v545, 0
  %v550 = vsel %vm63, %v539, 0
  %v553 = vsel %vm63, %v540, 0
  %555 = vmatpush.msra.mxu0 0.0
  %556 = vmatpush.msra.mxu0 0.0
  %557 = vmatpush.msra.mxu0 0.0
  %558 = vmatpush.msra.mxu0 0.0
  %559 = vmatpush.msra.mxu0 0.0
  %560 = vmatpush.msra.mxu0 0.0
  %561 = vmatpush.msra.mxu0 0.0
  %562 = vmatpush.msra.mxu0 0.0
  %563 = vmatpush.msra.mxu0 0.0
  %564 = vmatpush.msra.mxu0 0.0
  %565 = vmatpush.msra.mxu0 0.0
  %566 = vmatpush.msra.mxu0 0.0
  %567 = vmatpush.msra.mxu0 %v544
  %568 = vmatpush.msra.mxu0 %v543
  %569 = vmatpush.msra.mxu0 %v542
  %570 = vmatpush.msra.mxu0 %v541
  %571 = vmatmul.f32.gmra.mxu0 %v550
  %v572 = vpop.f32.mrf.mxu0
  %v573 = vadd.f32 %v547, %v572
  %574 = vmatmul.f32.gmra.mxu0 %v553
  %v575 = vpop.f32.mrf.mxu0
  %v576 = vadd.f32 %v547, %v575
  %577 = vdwg.mxu0
  %v578 = vmul.f32 %v573, %v573
  %v579 = vmul.f32 %v576, %v576
  %v580 = vmul.f32 %v573, %v578
  %v581 = vmul.f32 %v576, %v579
  %v582 = vmul.f32 %v580, 0.044715
  %v583 = vmul.f32 %v581, 0.044715
  %v584 = vadd.f32 %v573, %v582
  %v585 = vadd.f32 %v576, %v583
  %v586 = vmul.f32 %v584, 0.7978846
  %v587 = vmul.f32 %v585, 0.7978846
  %v588 = vtanh.pop %v586
  %v589 = vtanh.pop %v587
  %v590 = vadd.f32 %v588, 1.0
  %v591 = vadd.f32 %v589, 1.0
  %v592 = vmul.f32 %v590, 0.5
  %v593 = vmul.f32 %v591, 0.5
  %v594 = vmul.f32 %v573, %v592
  %v595 = vmul.f32 %v576, %v593
  %v596 = vld [vmem:[%s12] sm:$0xff]
  %v597 = vld [vmem:[%s12 + $0x8] sm:$0xff]
  %v598 = vld [vmem:[%s12 + $0x10] sm:$0xff]
  %v599 = vld [vmem:[%s12 + $0x18] sm:$0xff]
  %v600 = vld [vmem:[%s12 + $0x20] sm:$0xff]
  %v601 = vld [vmem:[%s12 + $0x28] sm:$0xff]
  %v602 = vld [vmem:[%s12 + $0x30] sm:$0xff]
  %v603 = vld [vmem:[%s12 + $0x38] sm:$0xff]
  %v604 = vld [vmem:[%s13] sm:$0x1]
  %v606 = vperm.slane %v604, 0
  %vm608 = vcmask 523264
  %v610 = vsel %vm608, %v594, 0
  %v613 = vsel %vm608, %v595, 0
  %615 = vmatpush.msra.mxu0 0.0
  %616 = vmatpush.msra.mxu0 0.0
  %617 = vmatpush.msra.mxu0 0.0
  %618 = vmatpush.msra.mxu0 0.0
  %619 = vmatpush.msra.mxu0 0.0
  %620 = vmatpush.msra.mxu0 0.0
  %621 = vmatpush.msra.mxu0 0.0
  %622 = vmatpush.msra.mxu0 0.0
  %623 = vmatpush.msra.mxu0 %v603
  %624 = vmatpush.msra.mxu0 %v602
  %625 = vmatpush.msra.mxu0 %v601
  %626 = vmatpush.msra.mxu0 %v600
  %627 = vmatpush.msra.mxu0 %v599
  %628 = vmatpush.msra.mxu0 %v598
  %629 = vmatpush.msra.mxu0 %v597
  %630 = vmatpush.msra.mxu0 %v596
  %631 = vmatmul.f32.gmra.mxu0 %v610
  %v632 = vpop.f32.mrf.mxu0
  %v633 = vadd.f32 %v606, %v632
  %634 = vmatmul.f32.gmra.mxu0 %v613
  %v635 = vpop.f32.mrf.mxu0
  %v636 = vadd.f32 %v606, %v635
  %637 = vdwg.mxu0
  %v638 = vadd.f32 %v633, %v539
  %v639 = vadd.f32 %v636, %v540
  %v640 = vld [vmem:[%s14] sm:$0x1]
  %v641 = vld [vmem:[%s15] sm:$0x1]
  %v642 = vsel %vm63, %v638, 0.0
  %643 = vadd.xlane.f32.xlu0 %v642
  %v644 = vpop.xlane.xlu0 %643
  %v645 = vsel %vm63, %v639, 0.0
  %646 = vadd.xlane.f32.xlu0 %v645
  %v647 = vpop.xlane.xlu0 %646
  %v648 = vmul.f32 %v644, %v76
  %v649 = vmul.f32 %v647, %v76
  %v650 = vsub.f32 %v638, %v648
  %v651 = vsub.f32 %v639, %v649
  %v652 = vmul.f32 %v650, %v650
  %v653 = vmul.f32 %v651, %v651
  %v654 = vsel %vm63, %v652, 0.0
  %655 = vadd.xlane.f32.xlu0 %v654
  %v656 = vpop.xlane.xlu0 %655
  %v657 = vsel %vm63, %v653, 0.0
  %658 = vadd.xlane.f32.xlu0 %v657
  %v659 = vpop.xlane.xlu0 %658
  %v660 = vmul.f32 %v656, %v76
  %v661 = vmul.f32 %v659, %v76
  %v662 = vadd.f32 %v660, 1e-12
  %v663 = vadd.f32 %v661, 1e-12
  %v664 = vrsqrt.pop %v662
  %v665 = vmul.f32 %v664, %v662
  %v666 = vmul.f32 %v665, %v664
  %v667 = vmul.f32 0.5, %v666
  %v668 = vsub.f32 1.5, %v667
  %v669 = vmul.f32 %v664, %v668
  %vm670 = vweird.f32 %v662
  %vm671 = vweird.f32 %v664
  %vm672 = vmor %vm670, %vm671
  %v673 = vsel %vm672, %v664, %v669
  %v674 = vrsqrt.pop %v663
  %v675 = vmul.f32 %v674, %v663
  %v676 = vmul.f32 %v675, %v674
  %v677 = vmul.f32 0.5, %v676
  %v678 = vsub.f32 1.5, %v677
  %v679 = vmul.f32 %v674, %v678
  %vm680 = vweird.f32 %v663
  %vm681 = vweird.f32 %v674
  %vm682 = vmor %vm680, %vm681
  %v683 = vsel %vm682, %v674, %v679
  %v684 = vmul.f32 %v650, %v673
  %v685 = vmul.f32 %v651, %v683
  %v687 = vperm.slane %v640, 0
  %v689 = vmul.f32 %v684, %v687
  %v690 = vmul.f32 %v685, %v687
  %v692 = vperm.slane %v641, 0
  %v694 = vadd.f32 %v689, %v692
  %v695 = vadd.f32 %v690, %v692
  %s696 = scalar_lea.vmem %s4, 32
  %v697 = vld [vmem:[%s696] sm:$0xff]
  %v698 = vld [vmem:[%s696 + $0x8] sm:$0xff]
  %v699 = vld [vmem:[%s696 + $0x10] sm:$0xff]
  %v700 = vld [vmem:[%s696 + $0x18] sm:$0xff]
  %s701 = scalar_lea.vmem %s5, 1
  %v702 = vld [vmem:[%s701] sm:$0x1]
  %v704 = vperm.slane %v702, 0
  %v707 = vsel %vm63, %v694, 0
  %v710 = vsel %vm63, %v695, 0
  %712 = vmatpush.msra.mxu0 0.0
  %713 = vmatpush.msra.mxu0 0.0
  %714 = vmatpush.msra.mxu0 0.0
  %715 = vmatpush.msra.mxu0 0.0
  %716 = vmatpush.msra.mxu0 0.0
  %717 = vmatpush.msra.mxu0 0.0
  %718 = vmatpush.msra.mxu0 0.0
  %719 = vmatpush.msra.mxu0 0.0
  %720 = vmatpush.msra.mxu0 0.0
  %721 = vmatpush.msra.mxu0 0.0
  %722 = vmatpush.msra.mxu0 0.0
  %723 = vmatpush.msra.mxu0 0.0
  %724 = vmatpush.msra.mxu0 %v700
  %725 = vmatpush.msra.mxu0 %v699
  %726 = vmatpush.msra.mxu0 %v698
  %727 = vmatpush.msra.mxu0 %v697
  %728 = vmatmul.f32.gmra.mxu0 %v707
  %v729 = vpop.f32.mrf.mxu0
  %v730 = vadd.f32 %v704, %v729
  %731 = vmatmul.f32.gmra.mxu0 %v710
  %v732 = vpop.f32.mrf.mxu0
  %v733 = vadd.f32 %v704, %v732
  %734 = vdwg.mxu0
  %s735 = scalar_lea.vmem %s6, 32
  %v736 = vld [vmem:[%s735] sm:$0xff]
  %v737 = vld [vmem:[%s735 + $0x8] sm:$0xff]
  %v738 = vld [vmem:[%s735 + $0x10] sm:$0xff]
  %v739 = vld [vmem:[%s735 + $0x18] sm:$0xff]
  %742 = vrot.lane.b32.xlu0 %v730, 96
  %v743 = vpop.permute.xlu0 %742
  %744 = vrot.lane.b32.xlu0 %v733, 96
  %v745 = vpop.permute.xlu0 %744
  %v746 = vsel %vm174, %v730, 0
  %v748 = vsel %vm174, %v733, 0
  %v750 = vsel %vm174, %v743, 0
  %v752 = vsel %vm174, %v745, 0
  %754 = vmatpush.xpose.msra.mxu0 0.0
  %755 = vmatpush.xpose.msra.mxu0 0.0
  %756 = vmatpush.xpose.msra.mxu0 0.0
  %757 = vmatpush.xpose.msra.mxu0 0.0
  %758 = vmatpush.xpose.msra.mxu0 0.0
  %759 = vmatpush.xpose.msra.mxu0 0.0
  %760 = vmatpush.xpose.msra.mxu0 0.0
  %761 = vmatpush.xpose.msra.mxu0 0.0
  %762 = vmatpush.xpose.msra.mxu0 0.0
  %763 = vmatpush.xpose.msra.mxu0 0.0
  %764 = vmatpush.xpose.msra.mxu0 0.0
  %765 = vmatpush.xpose.msra.mxu0 0.0
  %766 = vmatpush.xpose.msra.mxu0 0.0
  %767 = vmatpush.xpose.msra.mxu0 0.0
  %768 = vmatpush.xpose.msra.mxu0 %v752
  %769 = vmatpush.xpose.msra.mxu0 %v750
  %770 = vmatmul.f32.gmra.mxu0 %v746
  %v771 = vpop.f32.mrf.mxu0
  %v772 = vadd.f32 0.0, %v771
  %773 = vmatmul.f32.gmra.mxu0 %v748
  %v774 = vpop.f32.mrf.mxu0
  %v775 = vadd.f32 0.0, %v774
  %776 = vdwg.mxu0
  %v777 = vmul.f32 %v772, 0.25
  %v778 = vmul.f32 %v775, 0.25
  %v779 = vadd.f32 %v777, %v125
  %v780 = vadd.f32 %v778, %v126
  %v781 = vsel %vm174, %v779, -inf
  %782 = vmax.xlane.f32.xlu0 %v781
  %v783 = vpop.xlane.xlu0 %782
  %v784 = vsel %vm174, %v780, -inf
  %785 = vmax.xlane.f32.xlu0 %v784
  %v786 = vpop.xlane.xlu0 %785
  %v787 = vsub.f32 %v779, %v783
  %v788 = vsub.f32 %v780, %v786
  %v789 = vmul.f32 %v787, 1.442695
  %v790 = vpow.pop %v789
  %v791 = vmul.f32 %v788, 1.442695
  %v792 = vpow.pop %v791
  %v793 = vsel %vm174, %v790, 0.0
  %794 = vadd.xlane.f32.xlu0 %v793
  %v795 = vpop.xlane.xlu0 %794
  %v796 = vsel %vm174, %v792, 0.0
  %797 = vadd.xlane.f32.xlu0 %v796
  %v798 = vpop.xlane.xlu0 %797
  %v799 = vrcp.pop %v795
  %v800 = vmul.f32 %v795, %v799
  %v801 = vsub.f32 1.0, %v800
  %v802 = vmul.f32 %v799, %v801
  %v803 = vadd.f32 %v799, %v802
  %vm804 = vweird.f32 %v795
  %vm805 = vweird.f32 %v799
  %vm806 = vmor %vm804, %vm805
  %v807 = vsel %vm806, %v799, %v803
  %v808 = vand.u32 2147483647, %v795
  %vm809 = vcmp.eq.f32.partialorder %v808, 8.507059e+37
  %v810 = vand.u32 %v795, 2147483648
  %v811 = vor.u32 1.1754944e-38, %v810
  %v812 = vsel %vm809, %v811, %v807
  %v813 = vmul.f32 %v790, %v812
  %v814 = vrcp.pop %v798
  %v815 = vmul.f32 %v798, %v814
  %v816 = vsub.f32 1.0, %v815
  %v817 = vmul.f32 %v814, %v816
  %v818 = vadd.f32 %v814, %v817
  %vm819 = vweird.f32 %v798
  %vm820 = vweird.f32 %v814
  %vm821 = vmor %vm819, %vm820
  %v822 = vsel %vm821, %v814, %v818
  %v823 = vand.u32 2147483647, %v798
  %vm824 = vcmp.eq.f32.partialorder %v823, 8.507059e+37
  %v825 = vand.u32 %v798, 2147483648
  %v826 = vor.u32 1.1754944e-38, %v825
  %v827 = vsel %vm824, %v826, %v822
  %v828 = vmul.f32 %v792, %v827
  %829 = vrot.lane.b32.xlu0 %v730, 64
  %v830 = vpop.permute.xlu0 %829
  %831 = vrot.lane.b32.xlu0 %v733, 64
  %v832 = vpop.permute.xlu0 %831
  %v836 = vsel %vm174, %v813, 0
  %v839 = vsel %vm174, %v828, 0
  %841 = vmatpush.msra.mxu0 0.0
  %842 = vmatpush.msra.mxu0 0.0
  %843 = vmatpush.msra.mxu0 0.0
  %844 = vmatpush.msra.mxu0 0.0
  %845 = vmatpush.msra.mxu0 0.0
  %846 = vmatpush.msra.mxu0 0.0
  %847 = vmatpush.msra.mxu0 0.0
  %848 = vmatpush.msra.mxu0 0.0
  %849 = vmatpush.msra.mxu0 0.0
  %850 = vmatpush.msra.mxu0 0.0
  %851 = vmatpush.msra.mxu0 0.0
  %852 = vmatpush.msra.mxu0 0.0
  %853 = vmatpush.msra.mxu0 0.0
  %854 = vmatpush.msra.mxu0 0.0
  %855 = vmatpush.msra.mxu0 %v832
  %856 = vmatpush.msra.mxu0 %v830
  %857 = vmatmul.f32.gmra.mxu0 %v836
  %v858 = vpop.f32.mrf.mxu0
  %v859 = vadd.f32 0.0, %v858
  %860 = vmatmul.f32.gmra.mxu0 %v839
  %v861 = vpop.f32.mrf.mxu0
  %v862 = vadd.f32 0.0, %v861
  %863 = vdwg.mxu0
  %864 = vrot.lane.b32.xlu0 %v730, 112
  %v865 = vpop.permute.xlu0 %864
  %866 = vrot.lane.b32.xlu0 %v733, 112
  %v867 = vpop.permute.xlu0 %866
  %868 = vrot.lane.b32.xlu0 %v730, 80
  %v869 = vpop.permute.xlu0 %868
  %870 = vrot.lane.b32.xlu0 %v733, 80
  %v871 = vpop.permute.xlu0 %870
  %v872 = vsel %vm174, %v865, 0
  %v874 = vsel %vm174, %v867, 0
  %v876 = vsel %vm174, %v869, 0
  %v878 = vsel %vm174, %v871, 0
  %880 = vmatpush.xpose.msra.mxu0 0.0
  %881 = vmatpush.xpose.msra.mxu0 0.0
  %882 = vmatpush.xpose.msra.mxu0 0.0
  %883 = vmatpush.xpose.msra.mxu0 0.0
  %884 = vmatpush.xpose.msra.mxu0 0.0
  %885 = vmatpush.xpose.msra.mxu0 0.0
  %886 = vmatpush.xpose.msra.mxu0 0.0
  %887 = vmatpush.xpose.msra.mxu0 0.0
  %888 = vmatpush.xpose.msra.mxu0 0.0
  %889 = vmatpush.xpose.msra.mxu0 0.0
  %890 = vmatpush.xpose.msra.mxu0 0.0
  %891 = vmatpush.xpose.msra.mxu0 0.0
  %892 = vmatpush.xpose.msra.mxu0 0.0
  %893 = vmatpush.xpose.msra.mxu0 0.0
  %894 = vmatpush.xpose.msra.mxu0 %v878
  %895 = vmatpush.xpose.msra.mxu0 %v876
  %896 = vmatmul.f32.gmra.mxu0 %v872
  %v897 = vpop.f32.mrf.mxu0
  %v898 = vadd.f32 0.0, %v897
  %899 = vmatmul.f32.gmra.mxu0 %v874
  %v900 = vpop.f32.mrf.mxu0
  %v901 = vadd.f32 0.0, %v900
  %902 = vdwg.mxu0
  %v903 = vmul.f32 %v898, 0.25
  %v904 = vmul.f32 %v901, 0.25
  %v905 = vadd.f32 %v903, %v125
  %v906 = vadd.f32 %v904, %v126
  %v907 = vsel %vm174, %v905, -inf
  %908 = vmax.xlane.f32.xlu0 %v907
  %v909 = vpop.xlane.xlu0 %908
  %v910 = vsel %vm174, %v906, -inf
  %911 = vmax.xlane.f32.xlu0 %v910
  %v912 = vpop.xlane.xlu0 %911
  %v913 = vsub.f32 %v905, %v909
  %v914 = vsub.f32 %v906, %v912
  %v915 = vmul.f32 %v913, 1.442695
  %v916 = vpow.pop %v915
  %v917 = vmul.f32 %v914, 1.442695
  %v918 = vpow.pop %v917
  %v919 = vsel %vm174, %v916, 0.0
  %920 = vadd.xlane.f32.xlu0 %v919
  %v921 = vpop.xlane.xlu0 %920
  %v922 = vsel %vm174, %v918, 0.0
  %923 = vadd.xlane.f32.xlu0 %v922
  %v924 = vpop.xlane.xlu0 %923
  %v925 = vrcp.pop %v921
  %v926 = vmul.f32 %v921, %v925
  %v927 = vsub.f32 1.0, %v926
  %v928 = vmul.f32 %v925, %v927
  %v929 = vadd.f32 %v925, %v928
  %vm930 = vweird.f32 %v921
  %vm931 = vweird.f32 %v925
  %vm932 = vmor %vm930, %vm931
  %v933 = vsel %vm932, %v925, %v929
  %v934 = vand.u32 2147483647, %v921
  %vm935 = vcmp.eq.f32.partialorder %v934, 8.507059e+37
  %v936 = vand.u32 %v921, 2147483648
  %v937 = vor.u32 1.1754944e-38, %v936
  %v938 = vsel %vm935, %v937, %v933
  %v939 = vmul.f32 %v916, %v938
  %v940 = vrcp.pop %v924
  %v941 = vmul.f32 %v924, %v940
  %v942 = vsub.f32 1.0, %v941
  %v943 = vmul.f32 %v940, %v942
  %v944 = vadd.f32 %v940, %v943
  %vm945 = vweird.f32 %v924
  %vm946 = vweird.f32 %v940
  %vm947 = vmor %vm945, %vm946
  %v948 = vsel %vm947, %v940, %v944
  %v949 = vand.u32 2147483647, %v924
  %vm950 = vcmp.eq.f32.partialorder %v949, 8.507059e+37
  %v951 = vand.u32 %v924, 2147483648
  %v952 = vor.u32 1.1754944e-38, %v951
  %v953 = vsel %vm950, %v952, %v948
  %v954 = vmul.f32 %v918, %v953
  %955 = vrot.lane.b32.xlu0 %v730, 48
  %v956 = vpop.permute.xlu0 %955
  %957 = vrot.lane.b32.xlu0 %v733, 48
  %v958 = vpop.permute.xlu0 %957
  %v962 = vsel %vm174, %v939, 0
  %v965 = vsel %vm174, %v954, 0
  %967 = vmatpush.msra.mxu0 0.0
  %968 = vmatpush.msra.mxu0 0.0
  %969 = vmatpush.msra.mxu0 0.0
  %970 = vmatpush.msra.mxu0 0.0
  %971 = vmatpush.msra.mxu0 0.0
  %972 = vmatpush.msra.mxu0 0.0
  %973 = vmatpush.msra.mxu0 0.0
  %974 = vmatpush.msra.mxu0 0.0
  %975 = vmatpush.msra.mxu0 0.0
  %976 = vmatpush.msra.mxu0 0.0
  %977 = vmatpush.msra.mxu0 0.0
  %978 = vmatpush.msra.mxu0 0.0
  %979 = vmatpush.msra.mxu0 0.0
  %980 = vmatpush.msra.mxu0 0.0
  %981 = vmatpush.msra.mxu0 %v958
  %982 = vmatpush.msra.mxu0 %v956
  %983 = vmatmul.f32.gmra.mxu0 %v962
  %v984 = vpop.f32.mrf.mxu0
  %v985 = vadd.f32 0.0, %v984
  %986 = vmatmul.f32.gmra.mxu0 %v965
  %v987 = vpop.f32.mrf.mxu0
  %v988 = vadd.f32 0.0, %v987
  %989 = vdwg.mxu0
  %v991 = vsel %vm174, %v985, 0
  %v994 = vsel %vm174, %v988, 0
  %996 = vmatpush.msra.mxu0 0.0
  %997 = vmatpush.msra.mxu0 0.0
  %998 = vmatpush.msra.mxu0 0.0
  %999 = vmatpush.msra.mxu0 0.0
  %1000 = vmatpush.msra.mxu0 0.0
  %1001 = vmatpush.msra.mxu0 0.0
  %1002 = vmatpush.msra.mxu0 0.0
  %1003 = vmatpush.msra.mxu0 0.0
  %1004 = vmatpush.msra.mxu0 0.0
  %1005 = vmatpush.msra.mxu0 0.0
  %1006 = vmatpush.msra.mxu0 0.0
  %1007 = vmatpush.msra.mxu0 0.0
  %1008 = vmatpush.msra.mxu0 0.0
  %1009 = vmatpush.msra.mxu0 0.0
  %1010 = vmatpush.msra.mxu0 %v739
  %1011 = vmatpush.msra.mxu0 %v738
  %1012 = vmatmul.f32.gmra.mxu0 %v991
  %v1013 = vpop.f32.mrf.mxu0
  %v1014 = vadd.f32 0.0, %v1013
  %1015 = vmatmul.f32.gmra.mxu0 %v994
  %v1016 = vpop.f32.mrf.mxu0
  %v1017 = vadd.f32 0.0, %v1016
  %1018 = vdwg.mxu0
  %v1020 = vsel %vm174, %v859, 0
  %v1023 = vsel %vm174, %v862, 0
  %1025 = vmatpush.msra.mxu0 0.0
  %1026 = vmatpush.msra.mxu0 0.0
  %1027 = vmatpush.msra.mxu0 0.0
  %1028 = vmatpush.msra.mxu0 0.0
  %1029 = vmatpush.msra.mxu0 0.0
  %1030 = vmatpush.msra.mxu0 0.0
  %1031 = vmatpush.msra.mxu0 0.0
  %1032 = vmatpush.msra.mxu0 0.0
  %1033 = vmatpush.msra.mxu0 0.0
  %1034 = vmatpush.msra.mxu0 0.0
  %1035 = vmatpush.msra.mxu0 0.0
  %1036 = vmatpush.msra.mxu0 0.0
  %1037 = vmatpush.msra.mxu0 0.0
  %1038 = vmatpush.msra.mxu0 0.0
  %1039 = vmatpush.msra.mxu0 %v737
  %1040 = vmatpush.msra.mxu0 %v736
  %1041 = vmatmul.f32.gmra.mxu0 %v1020
  %v1042 = vpop.f32.mrf.mxu0
  %v1043 = vadd.f32 %v1014, %v1042
  %1044 = vmatmul.f32.gmra.mxu0 %v1023
  %v1045 = vpop.f32.mrf.mxu0
  %v1046 = vadd.f32 %v1017, %v1045
  %1047 = vdwg.mxu0
  %s1048 = scalar_lea.vmem %s7, 1
  %v1049 = vld [vmem:[%s1048] sm:$0x1]
  %v1051 = vperm.slane %v1049, 0
  %v1053 = vadd.f32 %v1043, %v1051
  %v1054 = vadd.f32 %v1046, %v1051
  %v1055 = vadd.f32 %v1053, %v694
  %v1056 = vadd.f32 %v1054, %v695
  %s1057 = scalar_lea.vmem %s8, 1
  %v1058 = vld [vmem:[%s1057] sm:$0x1]
  %s1059 = scalar_lea.vmem %s9, 1
  %v1060 = vld [vmem:[%s1059] sm:$0x1]
  %v1061 = vsel %vm63, %v1055, 0.0
  %1062 = vadd.xlane.f32.xlu0 %v1061
  %v1063 = vpop.xlane.xlu0 %1062
  %v1064 = vsel %vm63, %v1056, 0.0
  %1065 = vadd.xlane.f32.xlu0 %v1064
  %v1066 = vpop.xlane.xlu0 %1065
  %v1067 = vmul.f32 %v1063, %v76
  %v1068 = vmul.f32 %v1066, %v76
  %v1069 = vsub.f32 %v1055, %v1067
  %v1070 = vsub.f32 %v1056, %v1068
  %v1071 = vmul.f32 %v1069, %v1069
  %v1072 = vmul.f32 %v1070, %v1070
  %v1073 = vsel %vm63, %v1071, 0.0
  %1074 = vadd.xlane.f32.xlu0 %v1073
  %v1075 = vpop.xlane.xlu0 %1074
  %v1076 = vsel %vm63, %v1072, 0.0
  %1077 = vadd.xlane.f32.xlu0 %v1076
  %v1078 = vpop.xlane.xlu0 %1077
  %v1079 = vmul.f32 %v1075, %v76
  %v1080 = vmul.f32 %v1078, %v76
  %v1081 = vadd.f32 %v1079, 1e-12
  %v1082 = vadd.f32 %v1080, 1e-12
  %v1083 = vrsqrt.pop %v1081
  %v1084 = vmul.f32 %v1083, %v1081
  %v1085 = vmul.f32 %v1084, %v1083
  %v1086 = vmul.f32 0.5, %v1085
  %v1087 = vsub.f32 1.5, %v1086
  %v1088 = vmul.f32 %v1083, %v1087
  %vm1089 = vweird.f32 %v1081
  %vm1090 = vweird.f32 %v1083
  %vm1091 = vmor %vm1089, %vm1090
  %v1092 = vsel %vm1091, %v1083, %v1088
  %v1093 = vrsqrt.pop %v1082
  %v1094 = vmul.f32 %v1093, %v1082
  %v1095 = vmul.f32 %v1094, %v1093
  %v1096 = vmul.f32 0.5, %v1095
  %v1097 = vsub.f32 1.5, %v1096
  %v1098 = vmul.f32 %v1093, %v1097
  %vm1099 = vweird.f32 %v1082
  %vm1100 = vweird.f32 %v1093
  %vm1101 = vmor %vm1099, %vm1100
  %v1102 = vsel %vm1101, %v1093, %v1098
  %v1103 = vmul.f32 %v1069, %v1092
  %v1104 = vmul.f32 %v1070, %v1102
  %v1106 = vperm.slane %v1058, 0
  %v1108 = vmul.f32 %v1103, %v1106
  %v1109 = vmul.f32 %v1104, %v1106
  %v1111 = vperm.slane %v1060, 0
  %v1113 = vadd.f32 %v1108, %v1111
  %v1114 = vadd.f32 %v1109, %v1111
  %s1115 = scalar_lea.vmem %s10, 32
  %v1116 = vld [vmem:[%s1115] sm:$0xff]
  %v1117 = vld [vmem:[%s1115 + $0x8] sm:$0xff]
  %v1118 = vld [vmem:[%s1115 + $0x10] sm:$0xff]
  %v1119 = vld [vmem:[%s1115 + $0x18] sm:$0xff]
  %s1120 = scalar_lea.vmem %s11, 1
  %v1121 = vld [vmem:[%s1120] sm:$0x1]
  %v1123 = vperm.slane %v1121, 0
  %v1126 = vsel %vm63, %v1113, 0
  %v1129 = vsel %vm63, %v1114, 0
  %1131 = vmatpush.msra.mxu0 0.0
  %1132 = vmatpush.msra.mxu0 0.0
  %1133 = vmatpush.msra.mxu0 0.0
  %1134 = vmatpush.msra.mxu0 0.0
  %1135 = vmatpush.msra.mxu0 0.0
  %1136 = vmatpush.msra.mxu0 0.0
  %1137 = vmatpush.msra.mxu0 0.0
  %1138 = vmatpush.msra.mxu0 0.0
  %1139 = vmatpush.msra.mxu0 0.0
  %1140 = vmatpush.msra.mxu0 0.0
  %1141 = vmatpush.msra.mxu0 0.0
  %1142 = vmatpush.msra.mxu0 0.0
  %1143 = vmatpush.msra.mxu0 %v1119
  %1144 = vmatpush.msra.mxu0 %v1118
  %1145 = vmatpush.msra.mxu0 %v1117
  %1146 = vmatpush.msra.mxu0 %v1116
  %1147 = vmatmul.f32.gmra.mxu0 %v1126
  %v1148 = vpop.f32.mrf.mxu0
  %v1149 = vadd.f32 %v1123, %v1148
  %1150 = vmatmul.f32.gmra.mxu0 %v1129
  %v1151 = vpop.f32.mrf.mxu0
  %v1152 = vadd.f32 %v1123, %v1151
  %1153 = vdwg.mxu0
  %v1154 = vmul.f32 %v1149, %v1149
  %v1155 = vmul.f32 %v1152, %v1152
  %v1156 = vmul.f32 %v1149, %v1154
  %v1157 = vmul.f32 %v1152, %v1155
  %v1158 = vmul.f32 %v1156, 0.044715
  %v1159 = vmul.f32 %v1157, 0.044715
  %v1160 = vadd.f32 %v1149, %v1158
  %v1161 = vadd.f32 %v1152, %v1159
  %v1162 = vmul.f32 %v1160, 0.7978846
  %v1163 = vmul.f32 %v1161, 0.7978846
  %v1164 = vtanh.pop %v1162
  %v1165 = vtanh.pop %v1163
  %v1166 = vadd.f32 %v1164, 1.0
  %v1167 = vadd.f32 %v1165, 1.0
  %v1168 = vmul.f32 %v1166, 0.5
  %v1169 = vmul.f32 %v1167, 0.5
  %v1170 = vmul.f32 %v1149, %v1168
  %v1171 = vmul.f32 %v1152, %v1169
  %s1172 = scalar_lea.vmem %s12, 64
  %v1173 = vld [vmem:[%s1172] sm:$0xff]
  %v1174 = vld [vmem:[%s1172 + $0x8] sm:$0xff]
  %v1175 = vld [vmem:[%s1172 + $0x10] sm:$0xff]
  %v1176 = vld [vmem:[%s1172 + $0x18] sm:$0xff]
  %v1177 = vld [vmem:[%s1172 + $0x20] sm:$0xff]
  %v1178 = vld [vmem:[%s1172 + $0x28] sm:$0xff]
  %v1179 = vld [vmem:[%s1172 + $0x30] sm:$0xff]
  %v1180 = vld [vmem:[%s1172 + $0x38] sm:$0xff]
  %s1181 = scalar_lea.vmem %s13, 1
  %v1182 = vld [vmem:[%s1181] sm:$0x1]
  %v1184 = vperm.slane %v1182, 0
  %v1187 = vsel %vm608, %v1170, 0
  %v1190 = vsel %vm608, %v1171, 0
  %1192 = vmatpush.msra.mxu0 0.0
  %1193 = vmatpush.msra.mxu0 0.0
  %1194 = vmatpush.msra.mxu0 0.0
  %1195 = vmatpush.msra.mxu0 0.0
  %1196 = vmatpush.msra.mxu0 0.0
  %1197 = vmatpush.msra.mxu0 0.0
  %1198 = vmatpush.msra.mxu0 0.0
  %1199 = vmatpush.msra.mxu0 0.0
  %1200 = vmatpush.msra.mxu0 %v1180
  %1201 = vmatpush.msra.mxu0 %v1179
  %1202 = vmatpush.msra.mxu0 %v1178
  %1203 = vmatpush.msra.mxu0 %v1177
  %1204 = vmatpush.msra.mxu0 %v1176
  %1205 = vmatpush.msra.mxu0 %v1175
  %1206 = vmatpush.msra.mxu0 %v1174
  %1207 = vmatpush.msra.mxu0 %v1173
  %1208 = vmatmul.f32.gmra.mxu0 %v1187
  %v1209 = vpop.f32.mrf.mxu0
  %v1210 = vadd.f32 %v1184, %v1209
  %1211 = vmatmul.f32.gmra.mxu0 %v1190
  %v1212 = vpop.f32.mrf.mxu0
  %v1213 = vadd.f32 %v1184, %v1212
  %1214 = vdwg.mxu0
  %v1215 = vadd.f32 %v1210, %v1113
  %v1216 = vadd.f32 %v1213, %v1114
  %s1217 = scalar_lea.vmem %s14, 1
  %v1218 = vld [vmem:[%s1217] sm:$0x1]
  %s1219 = scalar_lea.vmem %s15, 1
  %v1220 = vld [vmem:[%s1219] sm:$0x1]
  %v1221 = vsel %vm63, %v1215, 0.0
  %1222 = vadd.xlane.f32.xlu0 %v1221
  %v1223 = vpop.xlane.xlu0 %1222
  %v1224 = vsel %vm63, %v1216, 0.0
  %1225 = vadd.xlane.f32.xlu0 %v1224
  %v1226 = vpop.xlane.xlu0 %1225
  %v1227 = vmul.f32 %v1223, %v76
  %v1228 = vmul.f32 %v1226, %v76
  %v1229 = vsub.f32 %v1215, %v1227
  %v1230 = vsub.f32 %v1216, %v1228
  %v1231 = vmul.f32 %v1229, %v1229
  %v1232 = vmul.f32 %v1230, %v1230
  %v1233 = vsel %vm63, %v1231, 0.0
  %1234 = vadd.xlane.f32.xlu0 %v1233
  %v1235 = vpop.xlane.xlu0 %1234
  %v1236 = vsel %vm63, %v1232, 0.0
  %1237 = vadd.xlane.f32.xlu0 %v1236
  %v1238 = vpop.xlane.xlu0 %1237
  %v1239 = vmul.f32 %v1235, %v76
  %v1240 = vmul.f32 %v1238, %v76
  %v1241 = vadd.f32 %v1239, 1e-12
  %v1242 = vadd.f32 %v1240, 1e-12
  %v1243 = vrsqrt.pop %v1241
  %v1244 = vmul.f32 %v1243, %v1241
  %v1245 = vmul.f32 %v1244, %v1243
  %v1246 = vmul.f32 0.5, %v1245
  %v1247 = vsub.f32 1.5, %v1246
  %v1248 = vmul.f32 %v1243, %v1247
  %vm1249 = vweird.f32 %v1241
  %vm1250 = vweird.f32 %v1243
  %vm1251 = vmor %vm1249, %vm1250
  %v1252 = vsel %vm1251, %v1243, %v1248
  %v1253 = vrsqrt.pop %v1242
  %v1254 = vmul.f32 %v1253, %v1242
  %v1255 = vmul.f32 %v1254, %v1253
  %v1256 = vmul.f32 0.5, %v1255
  %v1257 = vsub.f32 1.5, %v1256
  %v1258 = vmul.f32 %v1253, %v1257
  %vm1259 = vweird.f32 %v1242
  %vm1260 = vweird.f32 %v1253
  %vm1261 = vmor %vm1259, %vm1260
  %v1262 = vsel %vm1261, %v1253, %v1258
  %v1263 = vmul.f32 %v1229, %v1252
  %v1264 = vmul.f32 %v1230, %v1262
  %v1266 = vperm.slane %v1218, 0
  %v1268 = vmul.f32 %v1263, %v1266
  %v1269 = vmul.f32 %v1264, %v1266
  %v1271 = vperm.slane %v1220, 0
  %v1273 = vadd.f32 %v1268, %v1271
  %v1274 = vadd.f32 %v1269, %v1271
  %v1275 = vld [vmem:[%s16] sm:$0xff]
  %v1276 = vld [vmem:[%s16 + $0x8] sm:$0xff]
  %v1277 = vld [vmem:[%s16 + $0x10] sm:$0xff]
  %v1278 = vld [vmem:[%s16 + $0x18] sm:$0xff]
  %v1279 = vld [vmem:[%s17] sm:$0x1]
  %v1281 = vperm.slane %v1279, 0
  %v1284 = vsel %vm63, %v1273, 0
  %v1287 = vsel %vm63, %v1274, 0
  %1289 = vmatpush.msra.mxu0 0.0
  %1290 = vmatpush.msra.mxu0 0.0
  %1291 = vmatpush.msra.mxu0 0.0
  %1292 = vmatpush.msra.mxu0 0.0
  %1293 = vmatpush.msra.mxu0 0.0
  %1294 = vmatpush.msra.mxu0 0.0
  %1295 = vmatpush.msra.mxu0 0.0
  %1296 = vmatpush.msra.mxu0 0.0
  %1297 = vmatpush.msra.mxu0 0.0
  %1298 = vmatpush.msra.mxu0 0.0
  %1299 = vmatpush.msra.mxu0 0.0
  %1300 = vmatpush.msra.mxu0 0.0
  %1301 = vmatpush.msra.mxu0 %v1278
  %1302 = vmatpush.msra.mxu0 %v1277
  %1303 = vmatpush.msra.mxu0 %v1276
  %1304 = vmatpush.msra.mxu0 %v1275
  %1305 = vmatmul.f32.gmra.mxu0 %v1284
  %v1306 = vpop.f32.mrf.mxu0
  %v1307 = vadd.f32 %v1281, %v1306
  %1308 = vmatmul.f32.gmra.mxu0 %v1287
  %v1309 = vpop.f32.mrf.mxu0
  %v1310 = vadd.f32 %v1281, %v1309
  %1311 = vdwg.mxu0
  %vm1312 = vcmask 195584
  %1313 = vst.msk [vmem:[%s18] sm:$0xff] %vm1312, %v1307
  %1314 = vst.msk [vmem:[%s18 + $0x8] sm:$0xff] %vm1312, %v1310
  // Predicated region
  $region74: #{mtrefine_forward.1} parent=0 // pred_check
    _
  $region75: #{mtrefine_forward.1} parent=0 // pred_check_branch
    %1316 = sbr.rel (0) target = $region77
  $region76: #{mtrefine_forward.1} parent=0 // pred_region
    _
  $region77: #{mtrefine_forward.1} parent=0 // pred_fallthru
    _
  // Predicated region
  $region78: #{mtrefine_forward.1} parent=0 // pred_check
    _
  $region79: #{mtrefine_forward.1} parent=0 // pred_check_branch
    %1318 = sbr.rel (0) target = $region81
  $region80: #{mtrefine_forward.1} parent=0 // pred_region
    _
  $region81: #{mtrefine_forward.1} parent=0 // pred_fallthru
    _

</llo_original>
